<compile_context>
chip_gen: v7x
topology: tpu7x:2x2x1
jax: 0.10.0
libtpu: 0.0.40
codegen_flags: <defaults>
</compile_context>

<pallas_src>
import jax
import jax.numpy as jnp
from jax import lax
from jax.experimental import pallas as pl
from jax.experimental.pallas import tpu as pltpu


def _char_rnn_attn_kernel(
    x_ref,    # (T, Bt, E)   time-major embedded inputs (mxu dtype)
    wih_ref,  # (E, H)       W_ih^T (mxu dtype)
    whh_ref,  # (H, H)       W_hh^T (mxu dtype)
    b_ref,    # (1, H)       b_ih + b_hh, f32
    wa_ref,   # (1, H)       attention weight row, f32
    ba_ref,   # (1, 1)       attention bias, f32
    wfc_ref,  # (H, Vt)      W_fc^T tile (mxu dtype)
    bfc_ref,  # (1, Vt)      f32
    out_ref,  # (Bt, Vt)     logits tile, f32
    xw_ref,   # scratch (T, Bt, H) f32 : hoisted input projection
    ctx_ref,  # scratch (Bt, H)   f32 : attention context, persists across V tiles
):
    T, Bt, E = x_ref.shape
    H = whh_ref.shape[0]

    @pl.when(pl.program_id(1) == 0)
    def _recurrence_and_attention():
        # Hoisted input projection + fused biases: one big MXU op, off the serial path.
        x = x_ref[...]
        xw = jnp.dot(x.reshape(T * Bt, E), wih_ref[...],
                     preferred_element_type=jnp.float32) + b_ref[...]
        xw_ref[...] = xw.reshape(T, Bt, H)

        whh = whh_ref[...]
        wa = wa_ref[...]                       # (1, H)
        ba = ba_ref[...]                       # (1, 1)

        def step(t, carry):
            h, m, l, ctx = carry
            # One dependent matmul + tanh per step (the serial chain).
            h = jnp.tanh(xw_ref[t] + jnp.dot(h.astype(whh.dtype), whh,
                                             preferred_element_type=jnp.float32))
            # Online-softmax attention update (free filler under the MXU latency chain).
            s = jnp.sum(h * wa, axis=-1, keepdims=True) + ba      # (Bt, 1)
            m_new = jnp.maximum(m, s)
            alpha = jnp.exp(m - m_new)
            p = jnp.exp(s - m_new)
            l = alpha * l + p
            ctx = alpha * ctx + p * h
            return h, m_new, l, ctx

        carry0 = (jnp.zeros((Bt, H), jnp.float32),
                  jnp.full((Bt, 1), -jnp.inf, jnp.float32),
                  jnp.zeros((Bt, 1), jnp.float32),
                  jnp.zeros((Bt, H), jnp.float32))
        _, _, l, ctx = lax.fori_loop(0, T, step, carry0, unroll=min(T, 8))

        # Exact division for the softmax normaliser (review: approx reciprocal on a
        # (Bt,1) tensor buys nothing and costs accuracy).
        ctx_ref[...] = ctx / l

    # Output projection for this vocab tile: lane-dense (Bt, Vt) store.
    out_ref[...] = (jnp.dot(ctx_ref[...].astype(wfc_ref.dtype), wfc_ref[...],
                            preferred_element_type=jnp.float32) + bfc_ref[...])


def _round_up(n, m):
    return pl.cdiv(n, m) * m


def char_rnn_attention_forward(x_idx, params, *, mxu_dtype=None):
    """x_idx: (B, T) int32 token indices. Returns (B, vocab) float32 logits."""
    emb_table = params["embed"]                      # (V, E)
    # Glue: the data-dependent embedding gather stays in JAX.
    x_emb = emb_table[x_idx].astype(jnp.float32)     # (B, T, E)
    B, T, E = x_emb.shape
    H = params["w_hh"].shape[0]
    V = params["w_fc"].shape[0]

    if mxu_dtype is None:
        # Review: cast MXU operands to bf16 at realistic widths (tanh/softmax stay f32).
        # At toy sizes keep f32 so the check against the reference is tight.
        mxu_dtype = jnp.bfloat16 if H >= 128 else jnp.float32

    # Batch tile: sublane multiple, grown up to 128 rows to fill the MXU M dimension.
    b_tile = min(128, _round_up(B, 8))
    Bp = _round_up(B, b_tile)
    # Vocab tile: lane multiple (<= 512) so W_fc streams through VMEM tile-by-tile.
    v_tile = min(512, _round_up(V, 128))
    Vp = _round_up(V, v_tile)

    # Time-major activations, batch padded to the tile, MXU dtype.
    x_tbe = jnp.transpose(x_emb, (1, 0, 2))          # (T, B, E)
    if Bp != B:
        x_tbe = jnp.pad(x_tbe, ((0, 0), (0, Bp - B), (0, 0)))
    x_tbe = x_tbe.astype(mxu_dtype)

    wih_t = params["w_ih"].T.astype(mxu_dtype)                            # (E, H)
    whh_t = params["w_hh"].T.astype(mxu_dtype)                            # (H, H)
    b = (params["b_ih"] + params["b_hh"])[None, :].astype(jnp.float32)    # (1, H)
    wa = params["w_attn"].reshape(1, H).astype(jnp.float32)               # (1, H)
    ba = params["b_attn"].reshape(1, 1).astype(jnp.float32)               # (1, 1)
    wfc_t = params["w_fc"].T                                              # (H, V)
    bfc = params["b_fc"][None, :]                                         # (1, V)
    if Vp != V:
        wfc_t = jnp.pad(wfc_t, ((0, 0), (0, Vp - V)))
        bfc = jnp.pad(bfc, ((0, 0), (0, Vp - V)))
    wfc_t = wfc_t.astype(mxu_dtype)
    bfc = bfc.astype(jnp.float32)

    # Constant-index weights: single-buffered (their index_map never changes).
    def const_spec(shape):
        n = len(shape)
        return pl.BlockSpec(shape, lambda i, j, _n=n: (0,) * _n,
                            pipeline_mode=pl.Buffered(1))

    grid = (Bp // b_tile, Vp // v_tile)

    grid_spec = pltpu.PrefetchScalarGridSpec(
        num_scalar_prefetch=0,
        grid=grid,
        in_specs=[
            pl.BlockSpec((T, b_tile, E), lambda i, j: (0, i, 0)),
            const_spec(wih_t.shape),
            const_spec(whh_t.shape),
            const_spec(b.shape),
            const_spec(wa.shape),
            const_spec(ba.shape),
            pl.BlockSpec((H, v_tile), lambda i, j: (0, j)),
            pl.BlockSpec((1, v_tile), lambda i, j: (0, j)),
        ],
        out_specs=pl.BlockSpec((b_tile, v_tile), lambda i, j: (i, j)),
        scratch_shapes=[
            pltpu.VMEM((T, b_tile, H), jnp.float32),   # hoisted input projection
            pltpu.VMEM((b_tile, H), jnp.float32),      # context, persists across V tiles
        ],
    )

    # Explicit VMEM budget (review): tile buffers + single-buffered weights + scratch.
    w_item = jnp.dtype(mxu_dtype).itemsize
    vmem_bytes = (
        2 * T * b_tile * E * w_item                      # x tile (double buffered)
        + (E * H + H * H) * w_item + (2 * H + 1) * 4     # constant weights (1 buffer)
        + 2 * (H * v_tile * w_item + v_tile * 4)         # W_fc / b_fc tiles
        + 2 * b_tile * v_tile * 4                        # output tile
        + (T + 1) * b_tile * H * 4                       # xw + ctx scratch
    )
    vmem_limit = int(min(100 * 1024 * 1024, max(2 * vmem_bytes, 16 * 1024 * 1024)))

    out = pl.pallas_call(
        _char_rnn_attn_kernel,
        out_shape=jax.ShapeDtypeStruct((Bp, Vp), jnp.float32),
        grid_spec=grid_spec,
        compiler_params=pltpu.CompilerParams(
            dimension_semantics=("parallel", "arbitrary"),
            vmem_limit_bytes=vmem_limit,
        ),
    )(x_tbe, wih_t, whh_t, b, wa, ba, wfc_t, bfc)

    return out[:B, :V]


def init_params(key, vocab_size, embedding_dim, hidden_dim):
    ks = jax.random.split(key, 9)
    scale = 0.1
    return {
        "embed": scale * jax.random.normal(ks[0], (vocab_size, embedding_dim), jnp.float32),
        "w_ih": scale * jax.random.normal(ks[1], (hidden_dim, embedding_dim), jnp.float32),
        "w_hh": scale * jax.random.normal(ks[2], (hidden_dim, hidden_dim), jnp.float32),
        "b_ih": scale * jax.random.normal(ks[3], (hidden_dim,), jnp.float32),
        "b_hh": scale * jax.random.normal(ks[4], (hidden_dim,), jnp.float32),
        "w_attn": scale * jax.random.normal(ks[5], (1, hidden_dim), jnp.float32),
        "b_attn": scale * jax.random.normal(ks[6], (1,), jnp.float32),
        "w_fc": scale * jax.random.normal(ks[7], (vocab_size, hidden_dim), jnp.float32),
        "b_fc": scale * jax.random.normal(ks[8], (vocab_size,), jnp.float32),
    }


def reference_forward(x_idx, params):
    """Pure-JAX reference implementing the PyTorch semantics exactly."""
    emb = params["embed"][x_idx]                       # (B, T, E)
    B, T, _ = emb.shape
    H = params["w_hh"].shape[0]
    h = jnp.zeros((B, H), jnp.float32)
    outs = []
    for t in range(T):
        h = jnp.tanh(emb[:, t, :] @ params["w_ih"].T + params["b_ih"]
                     + h @ params["w_hh"].T + params["b_hh"])
        outs.append(h)
    out = jnp.stack(outs, axis=1)                      # (B, T, H)
    scores = jnp.squeeze(out @ params["w_attn"].T + params["b_attn"], axis=2)  # (B, T)
    attn = jax.nn.softmax(scores, axis=1)
    context = jnp.sum(attn[:, :, None] * out, axis=1)  # (B, H)
    return context @ params["w_fc"].T + params["b_fc"]


if __name__ == "__main__":
    vocab_size = 16
    embedding_dim = 16
    hidden_dim = 32
    B, T = 2, 8

    key = jax.random.PRNGKey(0)
    k_params, k_x = jax.random.split(key)
    params = init_params(k_params, vocab_size, embedding_dim, hidden_dim)
    x_idx = jax.random.randint(k_x, (B, T), 0, vocab_size, dtype=jnp.int32)

    fwd = jax.jit(char_rnn_attention_forward, static_argnames=("mxu_dtype",))
    logits = jax.block_until_ready(fwd(x_idx, params))

    ref = reference_forward(x_idx, params)
    assert logits.shape == (B, vocab_size)
    # Exact softmax division + f32 path at this toy size -> tight tolerance.
    err = float(jnp.max(jnp.abs(logits - ref)))
    assert jnp.allclose(logits, ref, atol=1e-3, rtol=1e-3), f"max abs err {err}"
    print("KERNEL_OK")
</pallas_src>

<mosaic_0001>
module attributes {stable_mosaic.version = 11 : i64} {
  func.func @_char_rnn_attn_kernel(%arg0: i32, %arg1: i32, %arg2: memref<8x8x16xf32, #tpu.memory_space<vmem>>, %arg3: memref<16x32xf32, #tpu.memory_space<vmem>>, %arg4: memref<32x32xf32, #tpu.memory_space<vmem>>, %arg5: memref<1x32xf32, #tpu.memory_space<vmem>>, %arg6: memref<1x32xf32, #tpu.memory_space<vmem>>, %arg7: memref<1x1xf32, #tpu.memory_space<vmem>>, %arg8: memref<32x128xf32, #tpu.memory_space<vmem>>, %arg9: memref<1x128xf32, #tpu.memory_space<vmem>>, %arg10: memref<8x128xf32, #tpu.memory_space<vmem>>, %arg11: memref<8x8x32xf32, #tpu.memory_space<vmem>>, %arg12: memref<8x32xf32, #tpu.memory_space<vmem>>) attributes {dimension_semantics = [#tpu.dimension_semantics<parallel>, #tpu.dimension_semantics<arbitrary>], iteration_bounds = array<i64: 1, 1>, scalar_prefetch = 0 : i64, scratch_operands = 2 : i64, tpu.core_type = #tpu.core_type<tc>, window_params = [{transform_indices = @transform_0, window_bounds = array<i64: 8, 8, 16>}, {pipeline_mode = #tpu.pipeline_mode<synchronous>, transform_indices = @transform_1, window_bounds = array<i64: 16, 32>}, {pipeline_mode = #tpu.pipeline_mode<synchronous>, transform_indices = @transform_2, window_bounds = array<i64: 32, 32>}, {pipeline_mode = #tpu.pipeline_mode<synchronous>, transform_indices = @transform_3, window_bounds = array<i64: 1, 32>}, {pipeline_mode = #tpu.pipeline_mode<synchronous>, transform_indices = @transform_4, window_bounds = array<i64: 1, 32>}, {pipeline_mode = #tpu.pipeline_mode<synchronous>, transform_indices = @transform_5, window_bounds = array<i64: 1, 1>}, {transform_indices = @transform_6, window_bounds = array<i64: 32, 128>}, {transform_indices = @transform_7, window_bounds = array<i64: 1, 128>}, {transform_indices = @transform_8, window_bounds = array<i64: 8, 128>}]} {
    %c0_i32 = arith.constant 0 : i32
    %0 = arith.cmpi eq, %arg1, %c0_i32 : i32
    %1 = arith.extui %0 : i1 to i32
    %c0_i32_0 = arith.constant 0 : i32
    %2 = arith.cmpi ne, %1, %c0_i32_0 : i32
    scf.if %2 {
      %c0_8 = arith.constant 0 : index
      %c0_9 = arith.constant 0 : index
      %c0_10 = arith.constant 0 : index
      %10 = vector.load %arg2[%c0_8, %c0_9, %c0_10] : memref<8x8x16xf32, #tpu.memory_space<vmem>>, vector<8x8x16xf32>
      %11 = vector.shape_cast %10 : vector<8x8x16xf32> to vector<64x16xf32>
      %c0_11 = arith.constant 0 : index
      %c0_12 = arith.constant 0 : index
      %12 = vector.load %arg3[%c0_11, %c0_12] : memref<16x32xf32, #tpu.memory_space<vmem>>, vector<16x32xf32>
      %cst_13 = arith.constant dense<0.000000e+00> : vector<64x32xf32>
      %13 = tpu.matmul %11, %12, %cst_13 {dimension_numbers = #tpu.dot_dimension_numbers<[1], [0], [0], [1], [0, 0, 1, 1], [], []>} : vector<64x16xf32>, vector<16x32xf32>, vector<64x32xf32> -> vector<64x32xf32>
      %c0_14 = arith.constant 0 : index
      %c0_15 = arith.constant 0 : index
      %14 = vector.load %arg5[%c0_14, %c0_15] : memref<1x32xf32, #tpu.memory_space<vmem>>, vector<1x32xf32>
      %15 = vector.broadcast %14 : vector<1x32xf32> to vector<64x32xf32>
      %16 = arith.addf %13, %15 : vector<64x32xf32>
      %17 = vector.shape_cast %16 : vector<64x32xf32> to vector<8x8x32xf32>
      %c0_16 = arith.constant 0 : index
      %c0_17 = arith.constant 0 : index
      %c0_18 = arith.constant 0 : index
      %18 = vector.load %arg11[%c0_16, %c0_17, %c0_18] : memref<8x8x32xf32, #tpu.memory_space<vmem>>, vector<8x8x32xf32>
      tpu.vector_store %arg11[%c0_16, %c0_17, %c0_18], %17 {strides = array<i32>} : memref<8x8x32xf32, #tpu.memory_space<vmem>>, vector<8x8x32xf32>,
      %c0_19 = arith.constant 0 : index
      %c0_20 = arith.constant 0 : index
      %19 = vector.load %arg4[%c0_19, %c0_20] : memref<32x32xf32, #tpu.memory_space<vmem>>, vector<32x32xf32>
      %c0_21 = arith.constant 0 : index
      %c0_22 = arith.constant 0 : index
      %20 = vector.load %arg6[%c0_21, %c0_22] : memref<1x32xf32, #tpu.memory_space<vmem>>, vector<1x32xf32>
      %c0_23 = arith.constant 0 : index
      %c0_24 = arith.constant 0 : index
      %21 = vector.load %arg7[%c0_23, %c0_24] : memref<1x1xf32, #tpu.memory_space<vmem>>, vector<1x1xf32>
      %cst_25 = arith.constant 0.000000e+00 : f32
      %22 = vector.broadcast %cst_25 : f32 to vector<8x32xf32>
      %cst_26 = arith.constant 0xFF800000 : f32
      %23 = vector.broadcast %cst_26 : f32 to vector<8x1xf32>
      %cst_27 = arith.constant 0.000000e+00 : f32
      %24 = vector.broadcast %cst_27 : f32 to vector<8x1xf32>
      %cst_28 = arith.constant 0.000000e+00 : f32
      %25 = vector.broadcast %cst_28 : f32 to vector<8x32xf32>
      %c0_i32_29 = arith.constant 0 : i32
      %26 = arith.index_cast %c0_i32_29 : i32 to index
      %c0_30 = arith.constant 0 : index
      %c0_31 = arith.constant 0 : index
      %27 = vector.load %arg11[%26, %c0_30, %c0_31] : memref<8x8x32xf32, #tpu.memory_space<vmem>>, vector<1x8x32xf32>
      %28 = vector.shape_cast %27 : vector<1x8x32xf32> to vector<8x32xf32>
      %cst_32 = arith.constant dense<0.000000e+00> : vector<8x32xf32>
      %29 = tpu.matmul %22, %19, %cst_32 {dimension_numbers = #tpu.dot_dimension_numbers<[1], [0], [0], [1], [0, 0, 1, 1], [], []>} : vector<8x32xf32>, vector<32x32xf32>, vector<8x32xf32> -> vector<8x32xf32>
      %30 = arith.addf %28, %29 : vector<8x32xf32>
      %31 = math.tanh %30 : vector<8x32xf32>
      %32 = vector.broadcast %20 : vector<1x32xf32> to vector<8x32xf32>
      %33 = arith.mulf %31, %32 : vector<8x32xf32>
      %cst_33 = arith.constant dense<0.000000e+00> : vector<8xf32>
      %34 = vector.multi_reduction <add>, %33, %cst_33 [1] : vector<8x32xf32> to vector<8xf32>
      %35 = vector.shape_cast %34 : vector<8xf32> to vector<8x1xf32>
      %36 = vector.broadcast %21 : vector<1x1xf32> to vector<8x1xf32>
      %37 = arith.addf %35, %36 : vector<8x1xf32>
      %38 = arith.maximumf %23, %37 : vector<8x1xf32>
      %39 = arith.subf %23, %38 : vector<8x1xf32>
      %40 = math.exp %39 : vector<8x1xf32>
      %41 = arith.subf %37, %38 : vector<8x1xf32>
      %42 = math.exp %41 : vector<8x1xf32>
      %43 = arith.mulf %40, %24 : vector<8x1xf32>
      %44 = arith.addf %43, %42 : vector<8x1xf32>
      %45 = vector.broadcast %40 : vector<8x1xf32> to vector<8x32xf32>
      %46 = arith.mulf %45, %25 : vector<8x32xf32>
      %47 = vector.broadcast %42 : vector<8x1xf32> to vector<8x32xf32>
      %48 = arith.mulf %47, %31 : vector<8x32xf32>
      %49 = arith.addf %46, %48 : vector<8x32xf32>
      %c1_i32 = arith.constant 1 : i32
      %50 = arith.index_cast %c1_i32 : i32 to index
      %c0_34 = arith.constant 0 : index
      %c0_35 = arith.constant 0 : index
      %51 = vector.load %arg11[%50, %c0_34, %c0_35] : memref<8x8x32xf32, #tpu.memory_space<vmem>>, vector<1x8x32xf32>
      %52 = vector.shape_cast %51 : vector<1x8x32xf32> to vector<8x32xf32>
      %cst_36 = arith.constant dense<0.000000e+00> : vector<8x32xf32>
      %53 = tpu.matmul %31, %19, %cst_36 {dimension_numbers = #tpu.dot_dimension_numbers<[1], [0], [0], [1], [0, 0, 1, 1], [], []>} : vector<8x32xf32>, vector<32x32xf32>, vector<8x32xf32> -> vector<8x32xf32>
      %54 = arith.addf %52, %53 : vector<8x32xf32>
      %55 = math.tanh %54 : vector<8x32xf32>
      %56 = vector.broadcast %20 : vector<1x32xf32> to vector<8x32xf32>
      %57 = arith.mulf %55, %56 : vector<8x32xf32>
      %cst_37 = arith.constant dense<0.000000e+00> : vector<8xf32>
      %58 = vector.multi_reduction <add>, %57, %cst_37 [1] : vector<8x32xf32> to vector<8xf32>
      %59 = vector.shape_cast %58 : vector<8xf32> to vector<8x1xf32>
      %60 = vector.broadcast %21 : vector<1x1xf32> to vector<8x1xf32>
      %61 = arith.addf %59, %60 : vector<8x1xf32>
      %62 = arith.maximumf %38, %61 : vector<8x1xf32>
      %63 = arith.subf %38, %62 : vector<8x1xf32>
      %64 = math.exp %63 : vector<8x1xf32>
      %65 = arith.subf %61, %62 : vector<8x1xf32>
      %66 = math.exp %65 : vector<8x1xf32>
      %67 = arith.mulf %64, %44 : vector<8x1xf32>
      %68 = arith.addf %67, %66 : vector<8x1xf32>
      %69 = vector.broadcast %64 : vector<8x1xf32> to vector<8x32xf32>
      %70 = arith.mulf %69, %49 : vector<8x32xf32>
      %71 = vector.broadcast %66 : vector<8x1xf32> to vector<8x32xf32>
      %72 = arith.mulf %71, %55 : vector<8x32xf32>
      %73 = arith.addf %70, %72 : vector<8x32xf32>
      %c2_i32 = arith.constant 2 : i32
      %74 = arith.index_cast %c2_i32 : i32 to index
      %c0_38 = arith.constant 0 : index
      %c0_39 = arith.constant 0 : index
      %75 = vector.load %arg11[%74, %c0_38, %c0_39] : memref<8x8x32xf32, #tpu.memory_space<vmem>>, vector<1x8x32xf32>
      %76 = vector.shape_cast %75 : vector<1x8x32xf32> to vector<8x32xf32>
      %cst_40 = arith.constant dense<0.000000e+00> : vector<8x32xf32>
      %77 = tpu.matmul %55, %19, %cst_40 {dimension_numbers = #tpu.dot_dimension_numbers<[1], [0], [0], [1], [0, 0, 1, 1], [], []>} : vector<8x32xf32>, vector<32x32xf32>, vector<8x32xf32> -> vector<8x32xf32>
      %78 = arith.addf %76, %77 : vector<8x32xf32>
      %79 = math.tanh %78 : vector<8x32xf32>
      %80 = vector.broadcast %20 : vector<1x32xf32> to vector<8x32xf32>
      %81 = arith.mulf %79, %80 : vector<8x32xf32>
      %cst_41 = arith.constant dense<0.000000e+00> : vector<8xf32>
      %82 = vector.multi_reduction <add>, %81, %cst_41 [1] : vector<8x32xf32> to vector<8xf32>
      %83 = vector.shape_cast %82 : vector<8xf32> to vector<8x1xf32>
      %84 = vector.broadcast %21 : vector<1x1xf32> to vector<8x1xf32>
      %85 = arith.addf %83, %84 : vector<8x1xf32>
      %86 = arith.maximumf %62, %85 : vector<8x1xf32>
      %87 = arith.subf %62, %86 : vector<8x1xf32>
      %88 = math.exp %87 : vector<8x1xf32>
      %89 = arith.subf %85, %86 : vector<8x1xf32>
      %90 = math.exp %89 : vector<8x1xf32>
      %91 = arith.mulf %88, %68 : vector<8x1xf32>
      %92 = arith.addf %91, %90 : vector<8x1xf32>
      %93 = vector.broadcast %88 : vector<8x1xf32> to vector<8x32xf32>
      %94 = arith.mulf %93, %73 : vector<8x32xf32>
      %95 = vector.broadcast %90 : vector<8x1xf32> to vector<8x32xf32>
      %96 = arith.mulf %95, %79 : vector<8x32xf32>
      %97 = arith.addf %94, %96 : vector<8x32xf32>
      %c3_i32 = arith.constant 3 : i32
      %98 = arith.index_cast %c3_i32 : i32 to index
      %c0_42 = arith.constant 0 : index
      %c0_43 = arith.constant 0 : index
      %99 = vector.load %arg11[%98, %c0_42, %c0_43] : memref<8x8x32xf32, #tpu.memory_space<vmem>>, vector<1x8x32xf32>
      %100 = vector.shape_cast %99 : vector<1x8x32xf32> to vector<8x32xf32>
      %cst_44 = arith.constant dense<0.000000e+00> : vector<8x32xf32>
      %101 = tpu.matmul %79, %19, %cst_44 {dimension_numbers = #tpu.dot_dimension_numbers<[1], [0], [0], [1], [0, 0, 1, 1], [], []>} : vector<8x32xf32>, vector<32x32xf32>, vector<8x32xf32> -> vector<8x32xf32>
      %102 = arith.addf %100, %101 : vector<8x32xf32>
      %103 = math.tanh %102 : vector<8x32xf32>
      %104 = vector.broadcast %20 : vector<1x32xf32> to vector<8x32xf32>
      %105 = arith.mulf %103, %104 : vector<8x32xf32>
      %cst_45 = arith.constant dense<0.000000e+00> : vector<8xf32>
      %106 = vector.multi_reduction <add>, %105, %cst_45 [1] : vector<8x32xf32> to vector<8xf32>
      %107 = vector.shape_cast %106 : vector<8xf32> to vector<8x1xf32>
      %108 = vector.broadcast %21 : vector<1x1xf32> to vector<8x1xf32>
      %109 = arith.addf %107, %108 : vector<8x1xf32>
      %110 = arith.maximumf %86, %109 : vector<8x1xf32>
      %111 = arith.subf %86, %110 : vector<8x1xf32>
      %112 = math.exp %111 : vector<8x1xf32>
      %113 = arith.subf %109, %110 : vector<8x1xf32>
      %114 = math.exp %113 : vector<8x1xf32>
      %115 = arith.mulf %112, %92 : vector<8x1xf32>
      %116 = arith.addf %115, %114 : vector<8x1xf32>
      %117 = vector.broadcast %112 : vector<8x1xf32> to vector<8x32xf32>
      %118 = arith.mulf %117, %97 : vector<8x32xf32>
      %119 = vector.broadcast %114 : vector<8x1xf32> to vector<8x32xf32>
      %120 = arith.mulf %119, %103 : vector<8x32xf32>
      %121 = arith.addf %118, %120 : vector<8x32xf32>
      %c4_i32 = arith.constant 4 : i32
      %122 = arith.index_cast %c4_i32 : i32 to index
      %c0_46 = arith.constant 0 : index
      %c0_47 = arith.constant 0 : index
      %123 = vector.load %arg11[%122, %c0_46, %c0_47] : memref<8x8x32xf32, #tpu.memory_space<vmem>>, vector<1x8x32xf32>
      %124 = vector.shape_cast %123 : vector<1x8x32xf32> to vector<8x32xf32>
      %cst_48 = arith.constant dense<0.000000e+00> : vector<8x32xf32>
      %125 = tpu.matmul %103, %19, %cst_48 {dimension_numbers = #tpu.dot_dimension_numbers<[1], [0], [0], [1], [0, 0, 1, 1], [], []>} : vector<8x32xf32>, vector<32x32xf32>, vector<8x32xf32> -> vector<8x32xf32>
      %126 = arith.addf %124, %125 : vector<8x32xf32>
      %127 = math.tanh %126 : vector<8x32xf32>
      %128 = vector.broadcast %20 : vector<1x32xf32> to vector<8x32xf32>
      %129 = arith.mulf %127, %128 : vector<8x32xf32>
      %cst_49 = arith.constant dense<0.000000e+00> : vector<8xf32>
      %130 = vector.multi_reduction <add>, %129, %cst_49 [1] : vector<8x32xf32> to vector<8xf32>
      %131 = vector.shape_cast %130 : vector<8xf32> to vector<8x1xf32>
      %132 = vector.broadcast %21 : vector<1x1xf32> to vector<8x1xf32>
      %133 = arith.addf %131, %132 : vector<8x1xf32>
      %134 = arith.maximumf %110, %133 : vector<8x1xf32>
      %135 = arith.subf %110, %134 : vector<8x1xf32>
      %136 = math.exp %135 : vector<8x1xf32>
      %137 = arith.subf %133, %134 : vector<8x1xf32>
      %138 = math.exp %137 : vector<8x1xf32>
      %139 = arith.mulf %136, %116 : vector<8x1xf32>
      %140 = arith.addf %139, %138 : vector<8x1xf32>
      %141 = vector.broadcast %136 : vector<8x1xf32> to vector<8x32xf32>
      %142 = arith.mulf %141, %121 : vector<8x32xf32>
      %143 = vector.broadcast %138 : vector<8x1xf32> to vector<8x32xf32>
      %144 = arith.mulf %143, %127 : vector<8x32xf32>
      %145 = arith.addf %142, %144 : vector<8x32xf32>
      %c5_i32 = arith.constant 5 : i32
      %146 = arith.index_cast %c5_i32 : i32 to index
      %c0_50 = arith.constant 0 : index
      %c0_51 = arith.constant 0 : index
      %147 = vector.load %arg11[%146, %c0_50, %c0_51] : memref<8x8x32xf32, #tpu.memory_space<vmem>>, vector<1x8x32xf32>
      %148 = vector.shape_cast %147 : vector<1x8x32xf32> to vector<8x32xf32>
      %cst_52 = arith.constant dense<0.000000e+00> : vector<8x32xf32>
      %149 = tpu.matmul %127, %19, %cst_52 {dimension_numbers = #tpu.dot_dimension_numbers<[1], [0], [0], [1], [0, 0, 1, 1], [], []>} : vector<8x32xf32>, vector<32x32xf32>, vector<8x32xf32> -> vector<8x32xf32>
      %150 = arith.addf %148, %149 : vector<8x32xf32>
      %151 = math.tanh %150 : vector<8x32xf32>
      %152 = vector.broadcast %20 : vector<1x32xf32> to vector<8x32xf32>
      %153 = arith.mulf %151, %152 : vector<8x32xf32>
      %cst_53 = arith.constant dense<0.000000e+00> : vector<8xf32>
      %154 = vector.multi_reduction <add>, %153, %cst_53 [1] : vector<8x32xf32> to vector<8xf32>
      %155 = vector.shape_cast %154 : vector<8xf32> to vector<8x1xf32>
      %156 = vector.broadcast %21 : vector<1x1xf32> to vector<8x1xf32>
      %157 = arith.addf %155, %156 : vector<8x1xf32>
      %158 = arith.maximumf %134, %157 : vector<8x1xf32>
      %159 = arith.subf %134, %158 : vector<8x1xf32>
      %160 = math.exp %159 : vector<8x1xf32>
      %161 = arith.subf %157, %158 : vector<8x1xf32>
      %162 = math.exp %161 : vector<8x1xf32>
      %163 = arith.mulf %160, %140 : vector<8x1xf32>
      %164 = arith.addf %163, %162 : vector<8x1xf32>
      %165 = vector.broadcast %160 : vector<8x1xf32> to vector<8x32xf32>
      %166 = arith.mulf %165, %145 : vector<8x32xf32>
      %167 = vector.broadcast %162 : vector<8x1xf32> to vector<8x32xf32>
      %168 = arith.mulf %167, %151 : vector<8x32xf32>
      %169 = arith.addf %166, %168 : vector<8x32xf32>
      %c6_i32 = arith.constant 6 : i32
      %170 = arith.index_cast %c6_i32 : i32 to index
      %c0_54 = arith.constant 0 : index
      %c0_55 = arith.constant 0 : index
      %171 = vector.load %arg11[%170, %c0_54, %c0_55] : memref<8x8x32xf32, #tpu.memory_space<vmem>>, vector<1x8x32xf32>
      %172 = vector.shape_cast %171 : vector<1x8x32xf32> to vector<8x32xf32>
      %cst_56 = arith.constant dense<0.000000e+00> : vector<8x32xf32>
      %173 = tpu.matmul %151, %19, %cst_56 {dimension_numbers = #tpu.dot_dimension_numbers<[1], [0], [0], [1], [0, 0, 1, 1], [], []>} : vector<8x32xf32>, vector<32x32xf32>, vector<8x32xf32> -> vector<8x32xf32>
      %174 = arith.addf %172, %173 : vector<8x32xf32>
      %175 = math.tanh %174 : vector<8x32xf32>
      %176 = vector.broadcast %20 : vector<1x32xf32> to vector<8x32xf32>
      %177 = arith.mulf %175, %176 : vector<8x32xf32>
      %cst_57 = arith.constant dense<0.000000e+00> : vector<8xf32>
      %178 = vector.multi_reduction <add>, %177, %cst_57 [1] : vector<8x32xf32> to vector<8xf32>
      %179 = vector.shape_cast %178 : vector<8xf32> to vector<8x1xf32>
      %180 = vector.broadcast %21 : vector<1x1xf32> to vector<8x1xf32>
      %181 = arith.addf %179, %180 : vector<8x1xf32>
      %182 = arith.maximumf %158, %181 : vector<8x1xf32>
      %183 = arith.subf %158, %182 : vector<8x1xf32>
      %184 = math.exp %183 : vector<8x1xf32>
      %185 = arith.subf %181, %182 : vector<8x1xf32>
      %186 = math.exp %185 : vector<8x1xf32>
      %187 = arith.mulf %184, %164 : vector<8x1xf32>
      %188 = arith.addf %187, %186 : vector<8x1xf32>
      %189 = vector.broadcast %184 : vector<8x1xf32> to vector<8x32xf32>
      %190 = arith.mulf %189, %169 : vector<8x32xf32>
      %191 = vector.broadcast %186 : vector<8x1xf32> to vector<8x32xf32>
      %192 = arith.mulf %191, %175 : vector<8x32xf32>
      %193 = arith.addf %190, %192 : vector<8x32xf32>
      %c7_i32 = arith.constant 7 : i32
      %194 = arith.index_cast %c7_i32 : i32 to index
      %c0_58 = arith.constant 0 : index
      %c0_59 = arith.constant 0 : index
      %195 = vector.load %arg11[%194, %c0_58, %c0_59] : memref<8x8x32xf32, #tpu.memory_space<vmem>>, vector<1x8x32xf32>
      %196 = vector.shape_cast %195 : vector<1x8x32xf32> to vector<8x32xf32>
      %cst_60 = arith.constant dense<0.000000e+00> : vector<8x32xf32>
      %197 = tpu.matmul %175, %19, %cst_60 {dimension_numbers = #tpu.dot_dimension_numbers<[1], [0], [0], [1], [0, 0, 1, 1], [], []>} : vector<8x32xf32>, vector<32x32xf32>, vector<8x32xf32> -> vector<8x32xf32>
      %198 = arith.addf %196, %197 : vector<8x32xf32>
      %199 = math.tanh %198 : vector<8x32xf32>
      %200 = vector.broadcast %20 : vector<1x32xf32> to vector<8x32xf32>
      %201 = arith.mulf %199, %200 : vector<8x32xf32>
      %cst_61 = arith.constant dense<0.000000e+00> : vector<8xf32>
      %202 = vector.multi_reduction <add>, %201, %cst_61 [1] : vector<8x32xf32> to vector<8xf32>
      %203 = vector.shape_cast %202 : vector<8xf32> to vector<8x1xf32>
      %204 = vector.broadcast %21 : vector<1x1xf32> to vector<8x1xf32>
      %205 = arith.addf %203, %204 : vector<8x1xf32>
      %206 = arith.maximumf %182, %205 : vector<8x1xf32>
      %207 = arith.subf %182, %206 : vector<8x1xf32>
      %208 = math.exp %207 : vector<8x1xf32>
      %209 = arith.subf %205, %206 : vector<8x1xf32>
      %210 = math.exp %209 : vector<8x1xf32>
      %211 = arith.mulf %208, %188 : vector<8x1xf32>
      %212 = arith.addf %211, %210 : vector<8x1xf32>
      %213 = vector.broadcast %208 : vector<8x1xf32> to vector<8x32xf32>
      %214 = arith.mulf %213, %193 : vector<8x32xf32>
      %215 = vector.broadcast %210 : vector<8x1xf32> to vector<8x32xf32>
      %216 = arith.mulf %215, %199 : vector<8x32xf32>
      %217 = arith.addf %214, %216 : vector<8x32xf32>
      %c8_i32 = arith.constant 8 : i32
      %218 = vector.broadcast %212 : vector<8x1xf32> to vector<8x32xf32>
      %219 = arith.divf %217, %218 : vector<8x32xf32>
      %c0_62 = arith.constant 0 : index
      %c0_63 = arith.constant 0 : index
      %220 = vector.load %arg12[%c0_62, %c0_63] : memref<8x32xf32, #tpu.memory_space<vmem>>, vector<8x32xf32>
      tpu.vector_store %arg12[%c0_62, %c0_63], %219 {strides = array<i32>} : memref<8x32xf32, #tpu.memory_space<vmem>>, vector<8x32xf32>,
    } else {
    }
    %c0 = arith.constant 0 : index
    %c0_1 = arith.constant 0 : index
    %3 = vector.load %arg12[%c0, %c0_1] : memref<8x32xf32, #tpu.memory_space<vmem>>, vector<8x32xf32>
    %c0_2 = arith.constant 0 : index
    %c0_3 = arith.constant 0 : index
    %4 = vector.load %arg8[%c0_2, %c0_3] : memref<32x128xf32, #tpu.memory_space<vmem>>, vector<32x128xf32>
    %cst = arith.constant dense<0.000000e+00> : vector<8x128xf32>
    %5 = tpu.matmul %3, %4, %cst {dimension_numbers = #tpu.dot_dimension_numbers<[1], [0], [0], [1], [0, 0, 1, 1], [], []>} : vector<8x32xf32>, vector<32x128xf32>, vector<8x128xf32> -> vector<8x128xf32>
    %c0_4 = arith.constant 0 : index
    %c0_5 = arith.constant 0 : index
    %6 = vector.load %arg9[%c0_4, %c0_5] : memref<1x128xf32, #tpu.memory_space<vmem>>, vector<1x128xf32>
    %7 = vector.broadcast %6 : vector<1x128xf32> to vector<8x128xf32>
    %8 = arith.addf %5, %7 : vector<8x128xf32>
    %c0_6 = arith.constant 0 : index
    %c0_7 = arith.constant 0 : index
    %9 = vector.load %arg10[%c0_6, %c0_7] : memref<8x128xf32, #tpu.memory_space<vmem>>, vector<8x128xf32>
    tpu.vector_store %arg10[%c0_6, %c0_7], %8 {strides = array<i32>} : memref<8x128xf32, #tpu.memory_space<vmem>>, vector<8x128xf32>,
    return
  }
  func.func @transform_0(%arg0: i32, %arg1: i32) -> (i32, i32, i32) {
    %c0_i32 = arith.constant 0 : i32
    %c0_i32_0 = arith.constant 0 : i32
    %c0_i32_1 = arith.constant 0 : i32
    return %c0_i32, %arg0, %c0_i32_0 : i32, i32, i32
  }
  func.func @transform_1(%arg0: i32, %arg1: i32) -> (i32, i32) {
    %c0_i32 = arith.constant 0 : i32
    %c0_i32_0 = arith.constant 0 : i32
    %c0_i32_1 = arith.constant 0 : i32
    return %c0_i32, %c0_i32_0 : i32, i32
  }
  func.func @transform_2(%arg0: i32, %arg1: i32) -> (i32, i32) {
    %c0_i32 = arith.constant 0 : i32
    %c0_i32_0 = arith.constant 0 : i32
    %c0_i32_1 = arith.constant 0 : i32
    return %c0_i32, %c0_i32_0 : i32, i32
  }
  func.func @transform_3(%arg0: i32, %arg1: i32) -> (i32, i32) {
    %c0_i32 = arith.constant 0 : i32
    %c0_i32_0 = arith.constant 0 : i32
    %c0_i32_1 = arith.constant 0 : i32
    return %c0_i32, %c0_i32_0 : i32, i32
  }
  func.func @transform_4(%arg0: i32, %arg1: i32) -> (i32, i32) {
    %c0_i32 = arith.constant 0 : i32
    %c0_i32_0 = arith.constant 0 : i32
    %c0_i32_1 = arith.constant 0 : i32
    return %c0_i32, %c0_i32_0 : i32, i32
  }
  func.func @transform_5(%arg0: i32, %arg1: i32) -> (i32, i32) {
    %c0_i32 = arith.constant 0 : i32
    %c0_i32_0 = arith.constant 0 : i32
    %c0_i32_1 = arith.constant 0 : i32
    return %c0_i32, %c0_i32_0 : i32, i32
  }
  func.func @transform_6(%arg0: i32, %arg1: i32) -> (i32, i32) {
    %c0_i32 = arith.constant 0 : i32
    %c0_i32_0 = arith.constant 0 : i32
    return %c0_i32, %arg1 : i32, i32
  }
  func.func @transform_7(%arg0: i32, %arg1: i32) -> (i32, i32) {
    %c0_i32 = arith.constant 0 : i32
    %c0_i32_0 = arith.constant 0 : i32
    return %c0_i32, %arg1 : i32, i32
  }
  func.func @transform_8(%arg0: i32, %arg1: i32) -> (i32, i32) {
    %c0_i32 = arith.constant 0 : i32
    return %arg0, %arg1 : i32, i32
  }
}

</mosaic_0001>

<llo_original>
// kernel: char_rnn_attention_forward.1
$region0: #{char_rnn_attention_forward.1}
  #allocation0 [shape = 'u32[]', space=smem, size = 0x4, offset = 0x4, fixed_abs, tag = 'smem constant byte address 0x4 - core index']
  #allocation1 [shape = 'u32[144,128]{1,0:T(1,128)}', space=vmem, size = 0x12000, scoped, tag = 'internal scratch']
  #allocation2 [shape = 'f32[8,8,32]{2,1,0:T(8,128)}', space=vmem, size = 0x8000, scoped, tag = 'scratch operand']
  #allocation3 [shape = 'f32[8,32]{1,0:T(8,128)}', space=vmem, size = 0x1000, scoped, tag = 'scratch operand']
  #allocation4 [shape = 'f32[1,1]{1,0:T(1,128)S(1)}', space=vmem, size = 0x200, scoped, tag = 'scoped memory for char_rnn_attention_forward.1']
  %s0 = inlined_call_operand.vmem [shape: f32[8,8,16], index: 0, kind: input, shape index: {}]
  %s1 = inlined_call_operand.vmem [shape: f32[16,32], index: 1, kind: input, shape index: {}]
  %s2 = inlined_call_operand.vmem [shape: f32[32,32], index: 2, kind: input, shape index: {}]
  %s3 = inlined_call_operand.vmem [shape: f32[1,32], index: 3, kind: input, shape index: {}]
  %s4 = inlined_call_operand.vmem [shape: f32[1,32], index: 4, kind: input, shape index: {}]
  %s5 = inlined_call_operand.<no memory space> [shape: f32[1,1], index: 5, kind: input, shape index: {}]
  %s6 = inlined_call_operand.vmem [shape: f32[32,128], index: 6, kind: input, shape index: {}]
  %s7 = inlined_call_operand.vmem [shape: f32[1,128], index: 7, kind: input, shape index: {}]
  %s8 = inlined_call_operand.vmem [shape: f32[8,128], index: 8, kind: output, shape index: {}]
  %s9 = sld [smem:[#allocation0]]
  $region46: #{char_rnn_attention_forward.1} parent=0
    _
  %s11 = ssub.s32 1, %s9
  %s12 = scalar_select 0, %s11, %s9
  %v13 = vstv %s5
  %14 = vst [vmem:[#allocation4] sm:$0x1] %v13
  // Predicated region
  $region2: #{char_rnn_attention_forward.1} parent=0 // pred_check
    _
  $region3: #{char_rnn_attention_forward.1} parent=0 // pred_check_branch
    %16 = sbr.rel (0) target = $region5
  $region4: #{char_rnn_attention_forward.1} parent=0 // pred_region
    _
  $region5: #{char_rnn_attention_forward.1} parent=0 // pred_fallthru
    _
  // Predicated region
  $region6: #{char_rnn_attention_forward.1} parent=0 // pred_check
    _
  $region7: #{char_rnn_attention_forward.1} parent=0 // pred_check_branch
    %18 = sbr.rel (0) target = $region9
  $region8: #{char_rnn_attention_forward.1} parent=0 // pred_region
    _
  $region9: #{char_rnn_attention_forward.1} parent=0 // pred_fallthru
    _
  // Predicated region
  $region10: #{char_rnn_attention_forward.1} parent=0 // pred_check
    _
  $region11: #{char_rnn_attention_forward.1} parent=0 // pred_check_branch
    %20 = sbr.rel (0) target = $region13
  $region12: #{char_rnn_attention_forward.1} parent=0 // pred_region
    _
  $region13: #{char_rnn_attention_forward.1} parent=0 // pred_fallthru
    _
  // Predicated region
  $region14: #{char_rnn_attention_forward.1} parent=0 // pred_check
    _
  $region15: #{char_rnn_attention_forward.1} parent=0 // pred_check_branch
    %22 = sbr.rel (0) target = $region17
  $region16: #{char_rnn_attention_forward.1} parent=0 // pred_region
    _
  $region17: #{char_rnn_attention_forward.1} parent=0 // pred_fallthru
    _
  // Predicated region
  $region18: #{char_rnn_attention_forward.1} parent=0 // pred_check
    _
  $region19: #{char_rnn_attention_forward.1} parent=0 // pred_check_branch
    %24 = sbr.rel (0) target = $region21
  $region20: #{char_rnn_attention_forward.1} parent=0 // pred_region
    _
  $region21: #{char_rnn_attention_forward.1} parent=0 // pred_fallthru
    _
  // Predicated region
  $region22: #{char_rnn_attention_forward.1} parent=0 // pred_check
    _
  $region23: #{char_rnn_attention_forward.1} parent=0 // pred_check_branch
    %26 = sbr.rel (0) target = $region25
  $region24: #{char_rnn_attention_forward.1} parent=0 // pred_region
    _
  $region25: #{char_rnn_attention_forward.1} parent=0 // pred_fallthru
    _
  // Predicated region
  $region26: #{char_rnn_attention_forward.1} parent=0 // pred_check
    _
  $region27: #{char_rnn_attention_forward.1} parent=0 // pred_check_branch
    %28 = sbr.rel (0) target = $region29
  $region28: #{char_rnn_attention_forward.1} parent=0 // pred_region
    _
  $region29: #{char_rnn_attention_forward.1} parent=0 // pred_fallthru
    _
  // Predicated region
  $region30: #{char_rnn_attention_forward.1} parent=0 // pred_check
    _
  $region31: #{char_rnn_attention_forward.1} parent=0 // pred_check_branch
    %30 = sbr.rel (0) target = $region33
  $region32: #{char_rnn_attention_forward.1} parent=0 // pred_region
    _
  $region33: #{char_rnn_attention_forward.1} parent=0 // pred_fallthru
    _
  %p31 = scmp.eq.s32.totalorder 0, 0
  // Predicated region
  $region34: #{char_rnn_attention_forward.1} parent=0 // pred_check
    %p32 = pneg %p31
  $region35: #{char_rnn_attention_forward.1} parent=0 // pred_check_branch
    %34 = sbr.rel (%p32) target = $region37
  $region36: #{char_rnn_attention_forward.1} parent=0 // pred_region
    %v35 = vld [vmem:[%s0] sm:$0xff]
    %v36 = vld [vmem:[%s0 + $0x8] sm:$0xff]
    %v37 = vld [vmem:[%s0 + $0x10] sm:$0xff]
    %v38 = vld [vmem:[%s0 + $0x18] sm:$0xff]
    %v39 = vld [vmem:[%s0 + $0x20] sm:$0xff]
    %v40 = vld [vmem:[%s0 + $0x28] sm:$0xff]
    %v41 = vld [vmem:[%s0 + $0x30] sm:$0xff]
    %v42 = vld [vmem:[%s0 + $0x38] sm:$0xff]
    %v43 = vld [vmem:[%s1] sm:$0xff]
    %v44 = vld [vmem:[%s1 + $0x8] sm:$0xff]
    %v45 = vld [vmem:[%s3] sm:$0x1]
    %v47 = vlaneseq
    %v48 = vshrl.u32 %v47, 7
    %v49 = vsub.s32 0, %v48
    %v50 = vrot.slane %v45, %v49
    %vm52 = vcmask 130048
    %v54 = vsel %vm52, %v35, 0
    %v57 = vsel %vm52, %v36, 0
    %v60 = vsel %vm52, %v37, 0
    %v63 = vsel %vm52, %v38, 0
    %v66 = vsel %vm52, %v39, 0
    %v69 = vsel %vm52, %v40, 0
    %v72 = vsel %vm52, %v41, 0
    %v75 = vsel %vm52, %v42, 0
    %77 = vmatprep.subr.mxu0 0.0
    %78 = vmatpush1.msra.mxu0 %v43
    %79 = vmatprep.subr.mxu0 0.0
    %80 = vmatpush1.msra.mxu0 %v44
    %81 = vmatprep.subr.mxu0 0.0
    %82 = vmatpush1.msra.mxu0 0.0
    %83 = vmatprep.subr.mxu0 0.0
    %84 = vmatpush1.msra.mxu0 0.0
    %85 = vmatprep.subr.mxu0 0.0
    %86 = vmatpush1.msra.mxu0 0.0
    %87 = vmatprep.subr.mxu0 0.0
    %88 = vmatpush1.msra.mxu0 0.0
    %89 = vmatprep.subr.mxu0 0.0
    %90 = vmatpush1.msra.mxu0 0.0
    %91 = vmatprep.subr.mxu0 0.0
    %92 = vmatpush1.msra.mxu0 0.0
    %93 = vmatprep.subr.mxu0 0.0
    %94 = vmatpush1.msra.mxu0 0.0
    %95 = vmatprep.subr.mxu0 0.0
    %96 = vmatpush1.msra.mxu0 0.0
    %97 = vmatprep.subr.mxu0 0.0
    %98 = vmatpush1.msra.mxu0 0.0
    %99 = vmatprep.subr.mxu0 0.0
    %100 = vmatpush1.msra.mxu0 0.0
    %101 = vmatprep.subr.mxu0 0.0
    %102 = vmatpush1.msra.mxu0 0.0
    %103 = vmatprep.subr.mxu0 0.0
    %104 = vmatpush1.msra.mxu0 0.0
    %105 = vmatprep.subr.mxu0 0.0
    %106 = vmatpush1.msra.mxu0 0.0
    %107 = vmatprep.subr.mxu0 0.0
    %108 = vmatpush1.msra.mxu0 0.0
    %109 = vmatprep.subr.mxu0 0.0
    %110 = vmatpush1.msra.mxu0 0.0
    %111 = vmatprep.subr.mxu0 0.0
    %112 = vmatpush1.msra.mxu0 0.0
    %113 = vmatprep.subr.mxu0 0.0
    %114 = vmatpush1.msra.mxu0 0.0
    %115 = vmatprep.subr.mxu0 0.0
    %116 = vmatpush1.msra.mxu0 0.0
    %117 = vmatprep.subr.mxu0 0.0
    %118 = vmatpush1.msra.mxu0 0.0
    %119 = vmatprep.subr.mxu0 0.0
    %120 = vmatpush1.msra.mxu0 0.0
    %121 = vmatprep.subr.mxu0 0.0
    %122 = vmatpush1.msra.mxu0 0.0
    %123 = vmatprep.subr.mxu0 0.0
    %124 = vmatpush1.msra.mxu0 0.0
    %125 = vmatprep.subr.mxu0 0.0
    %126 = vmatpush1.msra.mxu0 0.0
    %127 = vmatprep.subr.mxu0 0.0
    %128 = vmatpush1.msra.mxu0 0.0
    %129 = vmatprep.subr.mxu0 0.0
    %130 = vmatpush1.msra.mxu0 0.0
    %131 = vmatprep.subr.mxu0 0.0
    %132 = vmatpush1.msra.mxu0 0.0
    %133 = vmatprep.subr.mxu0 0.0
    %134 = vmatpush1.msra.mxu0 0.0
    %135 = vmatprep.subr.mxu0 0.0
    %136 = vmatpush1.msra.mxu0 0.0
    %137 = vmatprep.subr.mxu0 0.0
    %138 = vmatpush1.msra.mxu0 0.0
    %139 = vmatprep.subr.mxu0 0.0
    %140 = vmatpush1.msra.mxu0 0.0
    %141 = vmatprep.mubr.f32.mxu0 0.0
    %142 = vmatmul.mubr.f32.gmra.mrb[0].mxu0 %v54
    %v143 = vpop.f32.mrb[0].mxu0
    %v144 = vadd.f32 %v50, %v143
    %v145 = vpop.f32.mrb[0].mxu0
    %146 = vmatprep.mubr.f32.mxu0 0.0
    %147 = vmatmul.mubr.f32.gmra.mrb[0].mxu0 %v57
    %v148 = vpop.f32.mrb[0].mxu0
    %v149 = vadd.f32 %v50, %v148
    %v150 = vpop.f32.mrb[0].mxu0
    %151 = vmatprep.mubr.f32.mxu0 0.0
    %152 = vmatmul.mubr.f32.gmra.mrb[0].mxu0 %v60
    %v153 = vpop.f32.mrb[0].mxu0
    %v154 = vadd.f32 %v50, %v153
    %v155 = vpop.f32.mrb[0].mxu0
    %156 = vmatprep.mubr.f32.mxu0 0.0
    %157 = vmatmul.mubr.f32.gmra.mrb[0].mxu0 %v63
    %v158 = vpop.f32.mrb[0].mxu0
    %v159 = vadd.f32 %v50, %v158
    %v160 = vpop.f32.mrb[0].mxu0
    %161 = vmatprep.mubr.f32.mxu0 0.0
    %162 = vmatmul.mubr.f32.gmra.mrb[0].mxu0 %v66
    %v163 = vpop.f32.mrb[0].mxu0
    %v164 = vadd.f32 %v50, %v163
    %v165 = vpop.f32.mrb[0].mxu0
    %166 = vmatprep.mubr.f32.mxu0 0.0
    %167 = vmatmul.mubr.f32.gmra.mrb[0].mxu0 %v69
    %v168 = vpop.f32.mrb[0].mxu0
    %v169 = vadd.f32 %v50, %v168
    %v170 = vpop.f32.mrb[0].mxu0
    %171 = vmatprep.mubr.f32.mxu0 0.0
    %172 = vmatmul.mubr.f32.gmra.mrb[0].mxu0 %v72
    %v173 = vpop.f32.mrb[0].mxu0
    %v174 = vadd.f32 %v50, %v173
    %v175 = vpop.f32.mrb[0].mxu0
    %176 = vmatprep.mubr.f32.mxu0 0.0
    %177 = vmatmul.mubr.f32.gmra.mrb[0].mxu0 %v75
    %v178 = vpop.f32.mrb[0].mxu0
    %v179 = vadd.f32 %v50, %v178
    %v180 = vpop.f32.mrb[0].mxu0
    %181 = vdwg.mxu0
    %vm182 = vcmask 261120
    %183 = vst.msk [vmem:[#allocation2] sm:$0xff] %vm182, %v144
    %184 = vst.msk [vmem:[#allocation2 + $0x8] sm:$0xff] %vm182, %v149
    %185 = vst.msk [vmem:[#allocation2 + $0x10] sm:$0xff] %vm182, %v154
    %186 = vst.msk [vmem:[#allocation2 + $0x18] sm:$0xff] %vm182, %v159
    %187 = vst.msk [vmem:[#allocation2 + $0x20] sm:$0xff] %vm182, %v164
    %188 = vst.msk [vmem:[#allocation2 + $0x28] sm:$0xff] %vm182, %v169
    %189 = vst.msk [vmem:[#allocation2 + $0x30] sm:$0xff] %vm182, %v174
    %190 = vst.msk [vmem:[#allocation2 + $0x38] sm:$0xff] %vm182, %v179
    %v191 = vld [vmem:[%s2] sm:$0xff]
    %v192 = vld [vmem:[%s2 + $0x8] sm:$0xff]
    %v193 = vld [vmem:[%s2 + $0x10] sm:$0xff]
    %v194 = vld [vmem:[%s2 + $0x18] sm:$0xff]
    %v195 = vld [vmem:[%s4] sm:$0x1]
    %v196 = vld [vmem:[#allocation4] sm:$0x1]
    %v197 = vld [vmem:[#allocation2] sm:$0xff]
    %v199 = vsel %vm182, 0.0, 0
    %201 = vmatprep.subr.mxu0 0.0
    %202 = vmatpush1.msra.mxu0 %v191
    %203 = vmatprep.subr.mxu0 0.0
    %204 = vmatpush1.msra.mxu0 %v192
    %205 = vmatprep.subr.mxu0 0.0
    %206 = vmatpush1.msra.mxu0 %v193
    %207 = vmatprep.subr.mxu0 0.0
    %208 = vmatpush1.msra.mxu0 %v194
    %209 = vmatprep.subr.mxu0 0.0
    %210 = vmatpush1.msra.mxu0 0.0
    %211 = vmatprep.subr.mxu0 0.0
    %212 = vmatpush1.msra.mxu0 0.0
    %213 = vmatprep.subr.mxu0 0.0
    %214 = vmatpush1.msra.mxu0 0.0
    %215 = vmatprep.subr.mxu0 0.0
    %216 = vmatpush1.msra.mxu0 0.0
    %217 = vmatprep.subr.mxu0 0.0
    %218 = vmatpush1.msra.mxu0 0.0
    %219 = vmatprep.subr.mxu0 0.0
    %220 = vmatpush1.msra.mxu0 0.0
    %221 = vmatprep.subr.mxu0 0.0
    %222 = vmatpush1.msra.mxu0 0.0
    %223 = vmatprep.subr.mxu0 0.0
    %224 = vmatpush1.msra.mxu0 0.0
    %225 = vmatprep.subr.mxu0 0.0
    %226 = vmatpush1.msra.mxu0 0.0
    %227 = vmatprep.subr.mxu0 0.0
    %228 = vmatpush1.msra.mxu0 0.0
    %229 = vmatprep.subr.mxu0 0.0
    %230 = vmatpush1.msra.mxu0 0.0
    %231 = vmatprep.subr.mxu0 0.0
    %232 = vmatpush1.msra.mxu0 0.0
    %233 = vmatprep.subr.mxu0 0.0
    %234 = vmatpush1.msra.mxu0 0.0
    %235 = vmatprep.subr.mxu0 0.0
    %236 = vmatpush1.msra.mxu0 0.0
    %237 = vmatprep.subr.mxu0 0.0
    %238 = vmatpush1.msra.mxu0 0.0
    %239 = vmatprep.subr.mxu0 0.0
    %240 = vmatpush1.msra.mxu0 0.0
    %241 = vmatprep.subr.mxu0 0.0
    %242 = vmatpush1.msra.mxu0 0.0
    %243 = vmatprep.subr.mxu0 0.0
    %244 = vmatpush1.msra.mxu0 0.0
    %245 = vmatprep.subr.mxu0 0.0
    %246 = vmatpush1.msra.mxu0 0.0
    %247 = vmatprep.subr.mxu0 0.0
    %248 = vmatpush1.msra.mxu0 0.0
    %249 = vmatprep.subr.mxu0 0.0
    %250 = vmatpush1.msra.mxu0 0.0
    %251 = vmatprep.subr.mxu0 0.0
    %252 = vmatpush1.msra.mxu0 0.0
    %253 = vmatprep.subr.mxu0 0.0
    %254 = vmatpush1.msra.mxu0 0.0
    %255 = vmatprep.subr.mxu0 0.0
    %256 = vmatpush1.msra.mxu0 0.0
    %257 = vmatprep.subr.mxu0 0.0
    %258 = vmatpush1.msra.mxu0 0.0
    %259 = vmatprep.subr.mxu0 0.0
    %260 = vmatpush1.msra.mxu0 0.0
    %261 = vmatprep.subr.mxu0 0.0
    %262 = vmatpush1.msra.mxu0 0.0
    %263 = vmatprep.subr.mxu0 0.0
    %264 = vmatpush1.msra.mxu0 0.0
    %265 = vmatprep.mubr.f32.mxu0 0.0
    %266 = vmatmul.mubr.f32.gmra.mrb[0].mxu0 %v199
    %v267 = vpop.f32.mrb[0].mxu0
    %v268 = vadd.f32 0.0, %v267
    %v269 = vpop.f32.mrb[0].mxu0
    %270 = vdwg.mxu0
    %v271 = vadd.f32 %v197, %v268
    %v272 = vtanh.pop %v271
    %v274 = vlaneseq
    %v275 = vshrl.u32 %v274, 7
    %v276 = vsub.s32 0, %v275
    %v277 = vrot.slane %v195, %v276
    %v279 = vmul.f32 %v272, %v277
    %v280 = vsel %vm182, %v279, 0.0
    %281 = vadd.xlane.f32.xlu0 %v280
    %v282 = vpop.xlane.xlu0 %281
    %v284 = vlaneseq
    %v285 = vshrl.u32 %v284, 7
    %v286 = vsub.s32 0, %v285
    %v287 = vrot.slane %v196, %v286
    %v289 = vadd.f32 %v282, %v287
    %v290 = vsub.f32 -inf, %v289
    %v291 = vmul.f32 %v290, 1.442695
    %v292 = vpow.pop %v291
    %v293 = vsub.f32 %v289, %v289
    %v294 = vmul.f32 %v293, 1.442695
    %v295 = vpow.pop %v294
    %v296 = vmul.f32 %v292, 0.0
    %v297 = vadd.f32 %v296, %v295
    %299 = vset.pattern.permute.xlu0 0
    %300 = vperm.xlu0 %299, %v292
    %v301 = vpop.permute.xlu0 %300
    %v303 = vmul.f32 %v301, 0.0
    %305 = vset.pattern.permute.xlu0 0
    %306 = vperm.xlu0 %305, %v295
    %v307 = vpop.permute.xlu0 %306
    %v309 = vmul.f32 %v307, %v272
    %v310 = vadd.f32 %v303, %v309
    %s311 = scalar_lea.vmem [#allocation2], 8
    %v312 = vld [vmem:[%s311] sm:$0xff]
    %v314 = vsel %vm182, %v272, 0
    %316 = vmatprep.subr.mxu0 0.0
    %317 = vmatpush1.msra.mxu0 %v191
    %318 = vmatprep.subr.mxu0 0.0
    %319 = vmatpush1.msra.mxu0 %v192
    %320 = vmatprep.subr.mxu0 0.0
    %321 = vmatpush1.msra.mxu0 %v193
    %322 = vmatprep.subr.mxu0 0.0
    %323 = vmatpush1.msra.mxu0 %v194
    %324 = vmatprep.subr.mxu0 0.0
    %325 = vmatpush1.msra.mxu0 0.0
    %326 = vmatprep.subr.mxu0 0.0
    %327 = vmatpush1.msra.mxu0 0.0
    %328 = vmatprep.subr.mxu0 0.0
    %329 = vmatpush1.msra.mxu0 0.0
    %330 = vmatprep.subr.mxu0 0.0
    %331 = vmatpush1.msra.mxu0 0.0
    %332 = vmatprep.subr.mxu0 0.0
    %333 = vmatpush1.msra.mxu0 0.0
    %334 = vmatprep.subr.mxu0 0.0
    %335 = vmatpush1.msra.mxu0 0.0
    %336 = vmatprep.subr.mxu0 0.0
    %337 = vmatpush1.msra.mxu0 0.0
    %338 = vmatprep.subr.mxu0 0.0
    %339 = vmatpush1.msra.mxu0 0.0
    %340 = vmatprep.subr.mxu0 0.0
    %341 = vmatpush1.msra.mxu0 0.0
    %342 = vmatprep.subr.mxu0 0.0
    %343 = vmatpush1.msra.mxu0 0.0
    %344 = vmatprep.subr.mxu0 0.0
    %345 = vmatpush1.msra.mxu0 0.0
    %346 = vmatprep.subr.mxu0 0.0
    %347 = vmatpush1.msra.mxu0 0.0
    %348 = vmatprep.subr.mxu0 0.0
    %349 = vmatpush1.msra.mxu0 0.0
    %350 = vmatprep.subr.mxu0 0.0
    %351 = vmatpush1.msra.mxu0 0.0
    %352 = vmatprep.subr.mxu0 0.0
    %353 = vmatpush1.msra.mxu0 0.0
    %354 = vmatprep.subr.mxu0 0.0
    %355 = vmatpush1.msra.mxu0 0.0
    %356 = vmatprep.subr.mxu0 0.0
    %357 = vmatpush1.msra.mxu0 0.0
    %358 = vmatprep.subr.mxu0 0.0
    %359 = vmatpush1.msra.mxu0 0.0
    %360 = vmatprep.subr.mxu0 0.0
    %361 = vmatpush1.msra.mxu0 0.0
    %362 = vmatprep.subr.mxu0 0.0
    %363 = vmatpush1.msra.mxu0 0.0
    %364 = vmatprep.subr.mxu0 0.0
    %365 = vmatpush1.msra.mxu0 0.0
    %366 = vmatprep.subr.mxu0 0.0
    %367 = vmatpush1.msra.mxu0 0.0
    %368 = vmatprep.subr.mxu0 0.0
    %369 = vmatpush1.msra.mxu0 0.0
    %370 = vmatprep.subr.mxu0 0.0
    %371 = vmatpush1.msra.mxu0 0.0
    %372 = vmatprep.subr.mxu0 0.0
    %373 = vmatpush1.msra.mxu0 0.0
    %374 = vmatprep.subr.mxu0 0.0
    %375 = vmatpush1.msra.mxu0 0.0
    %376 = vmatprep.subr.mxu0 0.0
    %377 = vmatpush1.msra.mxu0 0.0
    %378 = vmatprep.subr.mxu0 0.0
    %379 = vmatpush1.msra.mxu0 0.0
    %380 = vmatprep.mubr.f32.mxu0 0.0
    %381 = vmatmul.mubr.f32.gmra.mrb[0].mxu0 %v314
    %v382 = vpop.f32.mrb[0].mxu0
    %v383 = vadd.f32 0.0, %v382
    %v384 = vpop.f32.mrb[0].mxu0
    %385 = vdwg.mxu0
    %v386 = vadd.f32 %v312, %v383
    %v387 = vtanh.pop %v386
    %v388 = vmul.f32 %v387, %v277
    %v389 = vsel %vm182, %v388, 0.0
    %390 = vadd.xlane.f32.xlu0 %v389
    %v391 = vpop.xlane.xlu0 %390
    %v392 = vadd.f32 %v391, %v287
    %v393 = vmax.f32 %v289, %v392
    %v394 = vsub.f32 %v289, %v393
    %v395 = vmul.f32 %v394, 1.442695
    %v396 = vpow.pop %v395
    %v397 = vsub.f32 %v392, %v393
    %v398 = vmul.f32 %v397, 1.442695
    %v399 = vpow.pop %v398
    %v400 = vmul.f32 %v396, %v297
    %v401 = vadd.f32 %v400, %v399
    %403 = vset.pattern.permute.xlu0 0
    %404 = vperm.xlu0 %403, %v396
    %v405 = vpop.permute.xlu0 %404
    %v407 = vmul.f32 %v405, %v310
    %409 = vset.pattern.permute.xlu0 0
    %410 = vperm.xlu0 %409, %v399
    %v411 = vpop.permute.xlu0 %410
    %v413 = vmul.f32 %v411, %v387
    %v414 = vadd.f32 %v407, %v413
    %s415 = scalar_lea.vmem [#allocation2], 16
    %v416 = vld [vmem:[%s415] sm:$0xff]
    %v418 = vsel %vm182, %v387, 0
    %420 = vmatprep.subr.mxu0 0.0
    %421 = vmatpush1.msra.mxu0 %v191
    %422 = vmatprep.subr.mxu0 0.0
    %423 = vmatpush1.msra.mxu0 %v192
    %424 = vmatprep.subr.mxu0 0.0
    %425 = vmatpush1.msra.mxu0 %v193
    %426 = vmatprep.subr.mxu0 0.0
    %427 = vmatpush1.msra.mxu0 %v194
    %428 = vmatprep.subr.mxu0 0.0
    %429 = vmatpush1.msra.mxu0 0.0
    %430 = vmatprep.subr.mxu0 0.0
    %431 = vmatpush1.msra.mxu0 0.0
    %432 = vmatprep.subr.mxu0 0.0
    %433 = vmatpush1.msra.mxu0 0.0
    %434 = vmatprep.subr.mxu0 0.0
    %435 = vmatpush1.msra.mxu0 0.0
    %436 = vmatprep.subr.mxu0 0.0
    %437 = vmatpush1.msra.mxu0 0.0
    %438 = vmatprep.subr.mxu0 0.0
    %439 = vmatpush1.msra.mxu0 0.0
    %440 = vmatprep.subr.mxu0 0.0
    %441 = vmatpush1.msra.mxu0 0.0
    %442 = vmatprep.subr.mxu0 0.0
    %443 = vmatpush1.msra.mxu0 0.0
    %444 = vmatprep.subr.mxu0 0.0
    %445 = vmatpush1.msra.mxu0 0.0
    %446 = vmatprep.subr.mxu0 0.0
    %447 = vmatpush1.msra.mxu0 0.0
    %448 = vmatprep.subr.mxu0 0.0
    %449 = vmatpush1.msra.mxu0 0.0
    %450 = vmatprep.subr.mxu0 0.0
    %451 = vmatpush1.msra.mxu0 0.0
    %452 = vmatprep.subr.mxu0 0.0
    %453 = vmatpush1.msra.mxu0 0.0
    %454 = vmatprep.subr.mxu0 0.0
    %455 = vmatpush1.msra.mxu0 0.0
    %456 = vmatprep.subr.mxu0 0.0
    %457 = vmatpush1.msra.mxu0 0.0
    %458 = vmatprep.subr.mxu0 0.0
    %459 = vmatpush1.msra.mxu0 0.0
    %460 = vmatprep.subr.mxu0 0.0
    %461 = vmatpush1.msra.mxu0 0.0
    %462 = vmatprep.subr.mxu0 0.0
    %463 = vmatpush1.msra.mxu0 0.0
    %464 = vmatprep.subr.mxu0 0.0
    %465 = vmatpush1.msra.mxu0 0.0
    %466 = vmatprep.subr.mxu0 0.0
    %467 = vmatpush1.msra.mxu0 0.0
    %468 = vmatprep.subr.mxu0 0.0
    %469 = vmatpush1.msra.mxu0 0.0
    %470 = vmatprep.subr.mxu0 0.0
    %471 = vmatpush1.msra.mxu0 0.0
    %472 = vmatprep.subr.mxu0 0.0
    %473 = vmatpush1.msra.mxu0 0.0
    %474 = vmatprep.subr.mxu0 0.0
    %475 = vmatpush1.msra.mxu0 0.0
    %476 = vmatprep.subr.mxu0 0.0
    %477 = vmatpush1.msra.mxu0 0.0
    %478 = vmatprep.subr.mxu0 0.0
    %479 = vmatpush1.msra.mxu0 0.0
    %480 = vmatprep.subr.mxu0 0.0
    %481 = vmatpush1.msra.mxu0 0.0
    %482 = vmatprep.subr.mxu0 0.0
    %483 = vmatpush1.msra.mxu0 0.0
    %484 = vmatprep.mubr.f32.mxu0 0.0
    %485 = vmatmul.mubr.f32.gmra.mrb[0].mxu0 %v418
    %v486 = vpop.f32.mrb[0].mxu0
    %v487 = vadd.f32 0.0, %v486
    %v488 = vpop.f32.mrb[0].mxu0
    %489 = vdwg.mxu0
    %v490 = vadd.f32 %v416, %v487
    %v491 = vtanh.pop %v490
    %v492 = vmul.f32 %v491, %v277
    %v493 = vsel %vm182, %v492, 0.0
    %494 = vadd.xlane.f32.xlu0 %v493
    %v495 = vpop.xlane.xlu0 %494
    %v496 = vadd.f32 %v495, %v287
    %v497 = vmax.f32 %v393, %v496
    %v498 = vsub.f32 %v393, %v497
    %v499 = vmul.f32 %v498, 1.442695
    %v500 = vpow.pop %v499
    %v501 = vsub.f32 %v496, %v497
    %v502 = vmul.f32 %v501, 1.442695
    %v503 = vpow.pop %v502
    %v504 = vmul.f32 %v500, %v401
    %v505 = vadd.f32 %v504, %v503
    %507 = vset.pattern.permute.xlu0 0
    %508 = vperm.xlu0 %507, %v500
    %v509 = vpop.permute.xlu0 %508
    %v511 = vmul.f32 %v509, %v414
    %513 = vset.pattern.permute.xlu0 0
    %514 = vperm.xlu0 %513, %v503
    %v515 = vpop.permute.xlu0 %514
    %v517 = vmul.f32 %v515, %v491
    %v518 = vadd.f32 %v511, %v517
    %s519 = scalar_lea.vmem [#allocation2], 24
    %v520 = vld [vmem:[%s519] sm:$0xff]
    %v522 = vsel %vm182, %v491, 0
    %524 = vmatprep.subr.mxu0 0.0
    %525 = vmatpush1.msra.mxu0 %v191
    %526 = vmatprep.subr.mxu0 0.0
    %527 = vmatpush1.msra.mxu0 %v192
    %528 = vmatprep.subr.mxu0 0.0
    %529 = vmatpush1.msra.mxu0 %v193
    %530 = vmatprep.subr.mxu0 0.0
    %531 = vmatpush1.msra.mxu0 %v194
    %532 = vmatprep.subr.mxu0 0.0
    %533 = vmatpush1.msra.mxu0 0.0
    %534 = vmatprep.subr.mxu0 0.0
    %535 = vmatpush1.msra.mxu0 0.0
    %536 = vmatprep.subr.mxu0 0.0
    %537 = vmatpush1.msra.mxu0 0.0
    %538 = vmatprep.subr.mxu0 0.0
    %539 = vmatpush1.msra.mxu0 0.0
    %540 = vmatprep.subr.mxu0 0.0
    %541 = vmatpush1.msra.mxu0 0.0
    %542 = vmatprep.subr.mxu0 0.0
    %543 = vmatpush1.msra.mxu0 0.0
    %544 = vmatprep.subr.mxu0 0.0
    %545 = vmatpush1.msra.mxu0 0.0
    %546 = vmatprep.subr.mxu0 0.0
    %547 = vmatpush1.msra.mxu0 0.0
    %548 = vmatprep.subr.mxu0 0.0
    %549 = vmatpush1.msra.mxu0 0.0
    %550 = vmatprep.subr.mxu0 0.0
    %551 = vmatpush1.msra.mxu0 0.0
    %552 = vmatprep.subr.mxu0 0.0
    %553 = vmatpush1.msra.mxu0 0.0
    %554 = vmatprep.subr.mxu0 0.0
    %555 = vmatpush1.msra.mxu0 0.0
    %556 = vmatprep.subr.mxu0 0.0
    %557 = vmatpush1.msra.mxu0 0.0
    %558 = vmatprep.subr.mxu0 0.0
    %559 = vmatpush1.msra.mxu0 0.0
    %560 = vmatprep.subr.mxu0 0.0
    %561 = vmatpush1.msra.mxu0 0.0
    %562 = vmatprep.subr.mxu0 0.0
    %563 = vmatpush1.msra.mxu0 0.0
    %564 = vmatprep.subr.mxu0 0.0
    %565 = vmatpush1.msra.mxu0 0.0
    %566 = vmatprep.subr.mxu0 0.0
    %567 = vmatpush1.msra.mxu0 0.0
    %568 = vmatprep.subr.mxu0 0.0
    %569 = vmatpush1.msra.mxu0 0.0
    %570 = vmatprep.subr.mxu0 0.0
    %571 = vmatpush1.msra.mxu0 0.0
    %572 = vmatprep.subr.mxu0 0.0
    %573 = vmatpush1.msra.mxu0 0.0
    %574 = vmatprep.subr.mxu0 0.0
    %575 = vmatpush1.msra.mxu0 0.0
    %576 = vmatprep.subr.mxu0 0.0
    %577 = vmatpush1.msra.mxu0 0.0
    %578 = vmatprep.subr.mxu0 0.0
    %579 = vmatpush1.msra.mxu0 0.0
    %580 = vmatprep.subr.mxu0 0.0
    %581 = vmatpush1.msra.mxu0 0.0
    %582 = vmatprep.subr.mxu0 0.0
    %583 = vmatpush1.msra.mxu0 0.0
    %584 = vmatprep.subr.mxu0 0.0
    %585 = vmatpush1.msra.mxu0 0.0
    %586 = vmatprep.subr.mxu0 0.0
    %587 = vmatpush1.msra.mxu0 0.0
    %588 = vmatprep.mubr.f32.mxu0 0.0
    %589 = vmatmul.mubr.f32.gmra.mrb[0].mxu0 %v522
    %v590 = vpop.f32.mrb[0].mxu0
    %v591 = vadd.f32 0.0, %v590
    %v592 = vpop.f32.mrb[0].mxu0
    %593 = vdwg.mxu0
    %v594 = vadd.f32 %v520, %v591
    %v595 = vtanh.pop %v594
    %v596 = vmul.f32 %v595, %v277
    %v597 = vsel %vm182, %v596, 0.0
    %598 = vadd.xlane.f32.xlu0 %v597
    %v599 = vpop.xlane.xlu0 %598
    %v600 = vadd.f32 %v599, %v287
    %v601 = vmax.f32 %v497, %v600
    %v602 = vsub.f32 %v497, %v601
    %v603 = vmul.f32 %v602, 1.442695
    %v604 = vpow.pop %v603
    %v605 = vsub.f32 %v600, %v601
    %v606 = vmul.f32 %v605, 1.442695
    %v607 = vpow.pop %v606
    %v608 = vmul.f32 %v604, %v505
    %v609 = vadd.f32 %v608, %v607
    %611 = vset.pattern.permute.xlu0 0
    %612 = vperm.xlu0 %611, %v604
    %v613 = vpop.permute.xlu0 %612
    %v615 = vmul.f32 %v613, %v518
    %617 = vset.pattern.permute.xlu0 0
    %618 = vperm.xlu0 %617, %v607
    %v619 = vpop.permute.xlu0 %618
    %v621 = vmul.f32 %v619, %v595
    %v622 = vadd.f32 %v615, %v621
    %s623 = scalar_lea.vmem [#allocation2], 32
    %v624 = vld [vmem:[%s623] sm:$0xff]
    %v626 = vsel %vm182, %v595, 0
    %628 = vmatprep.subr.mxu0 0.0
    %629 = vmatpush1.msra.mxu0 %v191
    %630 = vmatprep.subr.mxu0 0.0
    %631 = vmatpush1.msra.mxu0 %v192
    %632 = vmatprep.subr.mxu0 0.0
    %633 = vmatpush1.msra.mxu0 %v193
    %634 = vmatprep.subr.mxu0 0.0
    %635 = vmatpush1.msra.mxu0 %v194
    %636 = vmatprep.subr.mxu0 0.0
    %637 = vmatpush1.msra.mxu0 0.0
    %638 = vmatprep.subr.mxu0 0.0
    %639 = vmatpush1.msra.mxu0 0.0
    %640 = vmatprep.subr.mxu0 0.0
    %641 = vmatpush1.msra.mxu0 0.0
    %642 = vmatprep.subr.mxu0 0.0
    %643 = vmatpush1.msra.mxu0 0.0
    %644 = vmatprep.subr.mxu0 0.0
    %645 = vmatpush1.msra.mxu0 0.0
    %646 = vmatprep.subr.mxu0 0.0
    %647 = vmatpush1.msra.mxu0 0.0
    %648 = vmatprep.subr.mxu0 0.0
    %649 = vmatpush1.msra.mxu0 0.0
    %650 = vmatprep.subr.mxu0 0.0
    %651 = vmatpush1.msra.mxu0 0.0
    %652 = vmatprep.subr.mxu0 0.0
    %653 = vmatpush1.msra.mxu0 0.0
    %654 = vmatprep.subr.mxu0 0.0
    %655 = vmatpush1.msra.mxu0 0.0
    %656 = vmatprep.subr.mxu0 0.0
    %657 = vmatpush1.msra.mxu0 0.0
    %658 = vmatprep.subr.mxu0 0.0
    %659 = vmatpush1.msra.mxu0 0.0
    %660 = vmatprep.subr.mxu0 0.0
    %661 = vmatpush1.msra.mxu0 0.0
    %662 = vmatprep.subr.mxu0 0.0
    %663 = vmatpush1.msra.mxu0 0.0
    %664 = vmatprep.subr.mxu0 0.0
    %665 = vmatpush1.msra.mxu0 0.0
    %666 = vmatprep.subr.mxu0 0.0
    %667 = vmatpush1.msra.mxu0 0.0
    %668 = vmatprep.subr.mxu0 0.0
    %669 = vmatpush1.msra.mxu0 0.0
    %670 = vmatprep.subr.mxu0 0.0
    %671 = vmatpush1.msra.mxu0 0.0
    %672 = vmatprep.subr.mxu0 0.0
    %673 = vmatpush1.msra.mxu0 0.0
    %674 = vmatprep.subr.mxu0 0.0
    %675 = vmatpush1.msra.mxu0 0.0
    %676 = vmatprep.subr.mxu0 0.0
    %677 = vmatpush1.msra.mxu0 0.0
    %678 = vmatprep.subr.mxu0 0.0
    %679 = vmatpush1.msra.mxu0 0.0
    %680 = vmatprep.subr.mxu0 0.0
    %681 = vmatpush1.msra.mxu0 0.0
    %682 = vmatprep.subr.mxu0 0.0
    %683 = vmatpush1.msra.mxu0 0.0
    %684 = vmatprep.subr.mxu0 0.0
    %685 = vmatpush1.msra.mxu0 0.0
    %686 = vmatprep.subr.mxu0 0.0
    %687 = vmatpush1.msra.mxu0 0.0
    %688 = vmatprep.subr.mxu0 0.0
    %689 = vmatpush1.msra.mxu0 0.0
    %690 = vmatprep.subr.mxu0 0.0
    %691 = vmatpush1.msra.mxu0 0.0
    %692 = vmatprep.mubr.f32.mxu0 0.0
    %693 = vmatmul.mubr.f32.gmra.mrb[0].mxu0 %v626
    %v694 = vpop.f32.mrb[0].mxu0
    %v695 = vadd.f32 0.0, %v694
    %v696 = vpop.f32.mrb[0].mxu0
    %697 = vdwg.mxu0
    %v698 = vadd.f32 %v624, %v695
    %v699 = vtanh.pop %v698
    %v700 = vmul.f32 %v699, %v277
    %v701 = vsel %vm182, %v700, 0.0
    %702 = vadd.xlane.f32.xlu0 %v701
    %v703 = vpop.xlane.xlu0 %702
    %v704 = vadd.f32 %v703, %v287
    %v705 = vmax.f32 %v601, %v704
    %v706 = vsub.f32 %v601, %v705
    %v707 = vmul.f32 %v706, 1.442695
    %v708 = vpow.pop %v707
    %v709 = vsub.f32 %v704, %v705
    %v710 = vmul.f32 %v709, 1.442695
    %v711 = vpow.pop %v710
    %v712 = vmul.f32 %v708, %v609
    %v713 = vadd.f32 %v712, %v711
    %715 = vset.pattern.permute.xlu0 0
    %716 = vperm.xlu0 %715, %v708
    %v717 = vpop.permute.xlu0 %716
    %v719 = vmul.f32 %v717, %v622
    %721 = vset.pattern.permute.xlu0 0
    %722 = vperm.xlu0 %721, %v711
    %v723 = vpop.permute.xlu0 %722
    %v725 = vmul.f32 %v723, %v699
    %v726 = vadd.f32 %v719, %v725
    %s727 = scalar_lea.vmem [#allocation2], 40
    %v728 = vld [vmem:[%s727] sm:$0xff]
    %v730 = vsel %vm182, %v699, 0
    %732 = vmatprep.subr.mxu0 0.0
    %733 = vmatpush1.msra.mxu0 %v191
    %734 = vmatprep.subr.mxu0 0.0
    %735 = vmatpush1.msra.mxu0 %v192
    %736 = vmatprep.subr.mxu0 0.0
    %737 = vmatpush1.msra.mxu0 %v193
    %738 = vmatprep.subr.mxu0 0.0
    %739 = vmatpush1.msra.mxu0 %v194
    %740 = vmatprep.subr.mxu0 0.0
    %741 = vmatpush1.msra.mxu0 0.0
    %742 = vmatprep.subr.mxu0 0.0
    %743 = vmatpush1.msra.mxu0 0.0
    %744 = vmatprep.subr.mxu0 0.0
    %745 = vmatpush1.msra.mxu0 0.0
    %746 = vmatprep.subr.mxu0 0.0
    %747 = vmatpush1.msra.mxu0 0.0
    %748 = vmatprep.subr.mxu0 0.0
    %749 = vmatpush1.msra.mxu0 0.0
    %750 = vmatprep.subr.mxu0 0.0
    %751 = vmatpush1.msra.mxu0 0.0
    %752 = vmatprep.subr.mxu0 0.0
    %753 = vmatpush1.msra.mxu0 0.0
    %754 = vmatprep.subr.mxu0 0.0
    %755 = vmatpush1.msra.mxu0 0.0
    %756 = vmatprep.subr.mxu0 0.0
    %757 = vmatpush1.msra.mxu0 0.0
    %758 = vmatprep.subr.mxu0 0.0
    %759 = vmatpush1.msra.mxu0 0.0
    %760 = vmatprep.subr.mxu0 0.0
    %761 = vmatpush1.msra.mxu0 0.0
    %762 = vmatprep.subr.mxu0 0.0
    %763 = vmatpush1.msra.mxu0 0.0
    %764 = vmatprep.subr.mxu0 0.0
    %765 = vmatpush1.msra.mxu0 0.0
    %766 = vmatprep.subr.mxu0 0.0
    %767 = vmatpush1.msra.mxu0 0.0
    %768 = vmatprep.subr.mxu0 0.0
    %769 = vmatpush1.msra.mxu0 0.0
    %770 = vmatprep.subr.mxu0 0.0
    %771 = vmatpush1.msra.mxu0 0.0
    %772 = vmatprep.subr.mxu0 0.0
    %773 = vmatpush1.msra.mxu0 0.0
    %774 = vmatprep.subr.mxu0 0.0
    %775 = vmatpush1.msra.mxu0 0.0
    %776 = vmatprep.subr.mxu0 0.0
    %777 = vmatpush1.msra.mxu0 0.0
    %778 = vmatprep.subr.mxu0 0.0
    %779 = vmatpush1.msra.mxu0 0.0
    %780 = vmatprep.subr.mxu0 0.0
    %781 = vmatpush1.msra.mxu0 0.0
    %782 = vmatprep.subr.mxu0 0.0
    %783 = vmatpush1.msra.mxu0 0.0
    %784 = vmatprep.subr.mxu0 0.0
    %785 = vmatpush1.msra.mxu0 0.0
    %786 = vmatprep.subr.mxu0 0.0
    %787 = vmatpush1.msra.mxu0 0.0
    %788 = vmatprep.subr.mxu0 0.0
    %789 = vmatpush1.msra.mxu0 0.0
    %790 = vmatprep.subr.mxu0 0.0
    %791 = vmatpush1.msra.mxu0 0.0
    %792 = vmatprep.subr.mxu0 0.0
    %793 = vmatpush1.msra.mxu0 0.0
    %794 = vmatprep.subr.mxu0 0.0
    %795 = vmatpush1.msra.mxu0 0.0
    %796 = vmatprep.mubr.f32.mxu0 0.0
    %797 = vmatmul.mubr.f32.gmra.mrb[0].mxu0 %v730
    %v798 = vpop.f32.mrb[0].mxu0
    %v799 = vadd.f32 0.0, %v798
    %v800 = vpop.f32.mrb[0].mxu0
    %801 = vdwg.mxu0
    %v802 = vadd.f32 %v728, %v799
    %v803 = vtanh.pop %v802
    %v804 = vmul.f32 %v803, %v277
    %v805 = vsel %vm182, %v804, 0.0
    %806 = vadd.xlane.f32.xlu0 %v805
    %v807 = vpop.xlane.xlu0 %806
    %v808 = vadd.f32 %v807, %v287
    %v809 = vmax.f32 %v705, %v808
    %v810 = vsub.f32 %v705, %v809
    %v811 = vmul.f32 %v810, 1.442695
    %v812 = vpow.pop %v811
    %v813 = vsub.f32 %v808, %v809
    %v814 = vmul.f32 %v813, 1.442695
    %v815 = vpow.pop %v814
    %v816 = vmul.f32 %v812, %v713
    %v817 = vadd.f32 %v816, %v815
    %819 = vset.pattern.permute.xlu0 0
    %820 = vperm.xlu0 %819, %v812
    %v821 = vpop.permute.xlu0 %820
    %v823 = vmul.f32 %v821, %v726
    %825 = vset.pattern.permute.xlu0 0
    %826 = vperm.xlu0 %825, %v815
    %v827 = vpop.permute.xlu0 %826
    %v829 = vmul.f32 %v827, %v803
    %v830 = vadd.f32 %v823, %v829
    %s831 = scalar_lea.vmem [#allocation2], 48
    %v832 = vld [vmem:[%s831] sm:$0xff]
    %v834 = vsel %vm182, %v803, 0
    %836 = vmatprep.subr.mxu0 0.0
    %837 = vmatpush1.msra.mxu0 %v191
    %838 = vmatprep.subr.mxu0 0.0
    %839 = vmatpush1.msra.mxu0 %v192
    %840 = vmatprep.subr.mxu0 0.0
    %841 = vmatpush1.msra.mxu0 %v193
    %842 = vmatprep.subr.mxu0 0.0
    %843 = vmatpush1.msra.mxu0 %v194
    %844 = vmatprep.subr.mxu0 0.0
    %845 = vmatpush1.msra.mxu0 0.0
    %846 = vmatprep.subr.mxu0 0.0
    %847 = vmatpush1.msra.mxu0 0.0
    %848 = vmatprep.subr.mxu0 0.0
    %849 = vmatpush1.msra.mxu0 0.0
    %850 = vmatprep.subr.mxu0 0.0
    %851 = vmatpush1.msra.mxu0 0.0
    %852 = vmatprep.subr.mxu0 0.0
    %853 = vmatpush1.msra.mxu0 0.0
    %854 = vmatprep.subr.mxu0 0.0
    %855 = vmatpush1.msra.mxu0 0.0
    %856 = vmatprep.subr.mxu0 0.0
    %857 = vmatpush1.msra.mxu0 0.0
    %858 = vmatprep.subr.mxu0 0.0
    %859 = vmatpush1.msra.mxu0 0.0
    %860 = vmatprep.subr.mxu0 0.0
    %861 = vmatpush1.msra.mxu0 0.0
    %862 = vmatprep.subr.mxu0 0.0
    %863 = vmatpush1.msra.mxu0 0.0
    %864 = vmatprep.subr.mxu0 0.0
    %865 = vmatpush1.msra.mxu0 0.0
    %866 = vmatprep.subr.mxu0 0.0
    %867 = vmatpush1.msra.mxu0 0.0
    %868 = vmatprep.subr.mxu0 0.0
    %869 = vmatpush1.msra.mxu0 0.0
    %870 = vmatprep.subr.mxu0 0.0
    %871 = vmatpush1.msra.mxu0 0.0
    %872 = vmatprep.subr.mxu0 0.0
    %873 = vmatpush1.msra.mxu0 0.0
    %874 = vmatprep.subr.mxu0 0.0
    %875 = vmatpush1.msra.mxu0 0.0
    %876 = vmatprep.subr.mxu0 0.0
    %877 = vmatpush1.msra.mxu0 0.0
    %878 = vmatprep.subr.mxu0 0.0
    %879 = vmatpush1.msra.mxu0 0.0
    %880 = vmatprep.subr.mxu0 0.0
    %881 = vmatpush1.msra.mxu0 0.0
    %882 = vmatprep.subr.mxu0 0.0
    %883 = vmatpush1.msra.mxu0 0.0
    %884 = vmatprep.subr.mxu0 0.0
    %885 = vmatpush1.msra.mxu0 0.0
    %886 = vmatprep.subr.mxu0 0.0
    %887 = vmatpush1.msra.mxu0 0.0
    %888 = vmatprep.subr.mxu0 0.0
    %889 = vmatpush1.msra.mxu0 0.0
    %890 = vmatprep.subr.mxu0 0.0
    %891 = vmatpush1.msra.mxu0 0.0
    %892 = vmatprep.subr.mxu0 0.0
    %893 = vmatpush1.msra.mxu0 0.0
    %894 = vmatprep.subr.mxu0 0.0
    %895 = vmatpush1.msra.mxu0 0.0
    %896 = vmatprep.subr.mxu0 0.0
    %897 = vmatpush1.msra.mxu0 0.0
    %898 = vmatprep.subr.mxu0 0.0
    %899 = vmatpush1.msra.mxu0 0.0
    %900 = vmatprep.mubr.f32.mxu0 0.0
    %901 = vmatmul.mubr.f32.gmra.mrb[0].mxu0 %v834
    %v902 = vpop.f32.mrb[0].mxu0
    %v903 = vadd.f32 0.0, %v902
    %v904 = vpop.f32.mrb[0].mxu0
    %905 = vdwg.mxu0
    %v906 = vadd.f32 %v832, %v903
    %v907 = vtanh.pop %v906
    %v908 = vmul.f32 %v907, %v277
    %v909 = vsel %vm182, %v908, 0.0
    %910 = vadd.xlane.f32.xlu0 %v909
    %v911 = vpop.xlane.xlu0 %910
    %v912 = vadd.f32 %v911, %v287
    %v913 = vmax.f32 %v809, %v912
    %v914 = vsub.f32 %v809, %v913
    %v915 = vmul.f32 %v914, 1.442695
    %v916 = vpow.pop %v915
    %v917 = vsub.f32 %v912, %v913
    %v918 = vmul.f32 %v917, 1.442695
    %v919 = vpow.pop %v918
    %v920 = vmul.f32 %v916, %v817
    %v921 = vadd.f32 %v920, %v919
    %923 = vset.pattern.permute.xlu0 0
    %924 = vperm.xlu0 %923, %v916
    %v925 = vpop.permute.xlu0 %924
    %v927 = vmul.f32 %v925, %v830
    %929 = vset.pattern.permute.xlu0 0
    %930 = vperm.xlu0 %929, %v919
    %v931 = vpop.permute.xlu0 %930
    %v933 = vmul.f32 %v931, %v907
    %v934 = vadd.f32 %v927, %v933
    %s935 = scalar_lea.vmem [#allocation2], 56
    %v936 = vld [vmem:[%s935] sm:$0xff]
    %v938 = vsel %vm182, %v907, 0
    %940 = vmatprep.subr.mxu0 0.0
    %941 = vmatpush1.msra.mxu0 %v191
    %942 = vmatprep.subr.mxu0 0.0
    %943 = vmatpush1.msra.mxu0 %v192
    %944 = vmatprep.subr.mxu0 0.0
    %945 = vmatpush1.msra.mxu0 %v193
    %946 = vmatprep.subr.mxu0 0.0
    %947 = vmatpush1.msra.mxu0 %v194
    %948 = vmatprep.subr.mxu0 0.0
    %949 = vmatpush1.msra.mxu0 0.0
    %950 = vmatprep.subr.mxu0 0.0
    %951 = vmatpush1.msra.mxu0 0.0
    %952 = vmatprep.subr.mxu0 0.0
    %953 = vmatpush1.msra.mxu0 0.0
    %954 = vmatprep.subr.mxu0 0.0
    %955 = vmatpush1.msra.mxu0 0.0
    %956 = vmatprep.subr.mxu0 0.0
    %957 = vmatpush1.msra.mxu0 0.0
    %958 = vmatprep.subr.mxu0 0.0
    %959 = vmatpush1.msra.mxu0 0.0
    %960 = vmatprep.subr.mxu0 0.0
    %961 = vmatpush1.msra.mxu0 0.0
    %962 = vmatprep.subr.mxu0 0.0
    %963 = vmatpush1.msra.mxu0 0.0
    %964 = vmatprep.subr.mxu0 0.0
    %965 = vmatpush1.msra.mxu0 0.0
    %966 = vmatprep.subr.mxu0 0.0
    %967 = vmatpush1.msra.mxu0 0.0
    %968 = vmatprep.subr.mxu0 0.0
    %969 = vmatpush1.msra.mxu0 0.0
    %970 = vmatprep.subr.mxu0 0.0
    %971 = vmatpush1.msra.mxu0 0.0
    %972 = vmatprep.subr.mxu0 0.0
    %973 = vmatpush1.msra.mxu0 0.0
    %974 = vmatprep.subr.mxu0 0.0
    %975 = vmatpush1.msra.mxu0 0.0
    %976 = vmatprep.subr.mxu0 0.0
    %977 = vmatpush1.msra.mxu0 0.0
    %978 = vmatprep.subr.mxu0 0.0
    %979 = vmatpush1.msra.mxu0 0.0
    %980 = vmatprep.subr.mxu0 0.0
    %981 = vmatpush1.msra.mxu0 0.0
    %982 = vmatprep.subr.mxu0 0.0
    %983 = vmatpush1.msra.mxu0 0.0
    %984 = vmatprep.subr.mxu0 0.0
    %985 = vmatpush1.msra.mxu0 0.0
    %986 = vmatprep.subr.mxu0 0.0
    %987 = vmatpush1.msra.mxu0 0.0
    %988 = vmatprep.subr.mxu0 0.0
    %989 = vmatpush1.msra.mxu0 0.0
    %990 = vmatprep.subr.mxu0 0.0
    %991 = vmatpush1.msra.mxu0 0.0
    %992 = vmatprep.subr.mxu0 0.0
    %993 = vmatpush1.msra.mxu0 0.0
    %994 = vmatprep.subr.mxu0 0.0
    %995 = vmatpush1.msra.mxu0 0.0
    %996 = vmatprep.subr.mxu0 0.0
    %997 = vmatpush1.msra.mxu0 0.0
    %998 = vmatprep.subr.mxu0 0.0
    %999 = vmatpush1.msra.mxu0 0.0
    %1000 = vmatprep.subr.mxu0 0.0
    %1001 = vmatpush1.msra.mxu0 0.0
    %1002 = vmatprep.subr.mxu0 0.0
    %1003 = vmatpush1.msra.mxu0 0.0
    %1004 = vmatprep.mubr.f32.mxu0 0.0
    %1005 = vmatmul.mubr.f32.gmra.mrb[0].mxu0 %v938
    %v1006 = vpop.f32.mrb[0].mxu0
    %v1007 = vadd.f32 0.0, %v1006
    %v1008 = vpop.f32.mrb[0].mxu0
    %1009 = vdwg.mxu0
    %v1010 = vadd.f32 %v936, %v1007
    %v1011 = vtanh.pop %v1010
    %v1012 = vmul.f32 %v1011, %v277
    %v1013 = vsel %vm182, %v1012, 0.0
    %1014 = vadd.xlane.f32.xlu0 %v1013
    %v1015 = vpop.xlane.xlu0 %1014
    %v1016 = vadd.f32 %v1015, %v287
    %v1017 = vmax.f32 %v913, %v1016
    %v1018 = vsub.f32 %v913, %v1017
    %v1019 = vmul.f32 %v1018, 1.442695
    %v1020 = vpow.pop %v1019
    %v1021 = vsub.f32 %v1016, %v1017
    %v1022 = vmul.f32 %v1021, 1.442695
    %v1023 = vpow.pop %v1022
    %v1024 = vmul.f32 %v1020, %v921
    %v1025 = vadd.f32 %v1024, %v1023
    %1027 = vset.pattern.permute.xlu0 0
    %1028 = vperm.xlu0 %1027, %v1020
    %v1029 = vpop.permute.xlu0 %1028
    %v1031 = vmul.f32 %v1029, %v934
    %1033 = vset.pattern.permute.xlu0 0
    %1034 = vperm.xlu0 %1033, %v1023
    %v1035 = vpop.permute.xlu0 %1034
    %v1037 = vmul.f32 %v1035, %v1011
    %v1038 = vadd.f32 %v1031, %v1037
    %1040 = vset.pattern.permute.xlu0 0
    %1041 = vperm.xlu0 %1040, %v1025
    %v1042 = vpop.permute.xlu0 %1041
    %v1044 = vrcp.pop %v1042
    %v1045 = vmul.f32 %v1038, %v1044
    %1046 = vst.msk [vmem:[#allocation3] sm:$0xff] %vm182, %v1045
  $region37: #{char_rnn_attention_forward.1} parent=0 // pred_fallthru
    _
  %v1047 = vld [vmem:[#allocation3] sm:$0xff]
  %v1048 = vld [vmem:[%s6] sm:$0xff]
  %v1049 = vld [vmem:[%s6 + $0x8] sm:$0xff]
  %v1050 = vld [vmem:[%s6 + $0x10] sm:$0xff]
  %v1051 = vld [vmem:[%s6 + $0x18] sm:$0xff]
  %v1052 = vld [vmem:[%s7] sm:$0x1]
  %v1054 = vlaneseq
  %v1055 = vshrl.u32 %v1054, 7
  %v1056 = vsub.s32 0, %v1055
  %v1057 = vrot.slane %v1052, %v1056
  %vm1059 = vcmask 261120
  %v1061 = vsel %vm1059, %v1047, 0
  %1063 = vmatprep.subr.mxu0 0.0
  %1064 = vmatpush1.msra.mxu0 %v1048
  %1065 = vmatprep.subr.mxu0 0.0
  %1066 = vmatpush1.msra.mxu0 %v1049
  %1067 = vmatprep.subr.mxu0 0.0
  %1068 = vmatpush1.msra.mxu0 %v1050
  %1069 = vmatprep.subr.mxu0 0.0
  %1070 = vmatpush1.msra.mxu0 %v1051
  %1071 = vmatprep.subr.mxu0 0.0
  %1072 = vmatpush1.msra.mxu0 0.0
  %1073 = vmatprep.subr.mxu0 0.0
  %1074 = vmatpush1.msra.mxu0 0.0
  %1075 = vmatprep.subr.mxu0 0.0
  %1076 = vmatpush1.msra.mxu0 0.0
  %1077 = vmatprep.subr.mxu0 0.0
  %1078 = vmatpush1.msra.mxu0 0.0
  %1079 = vmatprep.subr.mxu0 0.0
  %1080 = vmatpush1.msra.mxu0 0.0
  %1081 = vmatprep.subr.mxu0 0.0
  %1082 = vmatpush1.msra.mxu0 0.0
  %1083 = vmatprep.subr.mxu0 0.0
  %1084 = vmatpush1.msra.mxu0 0.0
  %1085 = vmatprep.subr.mxu0 0.0
  %1086 = vmatpush1.msra.mxu0 0.0
  %1087 = vmatprep.subr.mxu0 0.0
  %1088 = vmatpush1.msra.mxu0 0.0
  %1089 = vmatprep.subr.mxu0 0.0
  %1090 = vmatpush1.msra.mxu0 0.0
  %1091 = vmatprep.subr.mxu0 0.0
  %1092 = vmatpush1.msra.mxu0 0.0
  %1093 = vmatprep.subr.mxu0 0.0
  %1094 = vmatpush1.msra.mxu0 0.0
  %1095 = vmatprep.subr.mxu0 0.0
  %1096 = vmatpush1.msra.mxu0 0.0
  %1097 = vmatprep.subr.mxu0 0.0
  %1098 = vmatpush1.msra.mxu0 0.0
  %1099 = vmatprep.subr.mxu0 0.0
  %1100 = vmatpush1.msra.mxu0 0.0
  %1101 = vmatprep.subr.mxu0 0.0
  %1102 = vmatpush1.msra.mxu0 0.0
  %1103 = vmatprep.subr.mxu0 0.0
  %1104 = vmatpush1.msra.mxu0 0.0
  %1105 = vmatprep.subr.mxu0 0.0
  %1106 = vmatpush1.msra.mxu0 0.0
  %1107 = vmatprep.subr.mxu0 0.0
  %1108 = vmatpush1.msra.mxu0 0.0
  %1109 = vmatprep.subr.mxu0 0.0
  %1110 = vmatpush1.msra.mxu0 0.0
  %1111 = vmatprep.subr.mxu0 0.0
  %1112 = vmatpush1.msra.mxu0 0.0
  %1113 = vmatprep.subr.mxu0 0.0
  %1114 = vmatpush1.msra.mxu0 0.0
  %1115 = vmatprep.subr.mxu0 0.0
  %1116 = vmatpush1.msra.mxu0 0.0
  %1117 = vmatprep.subr.mxu0 0.0
  %1118 = vmatpush1.msra.mxu0 0.0
  %1119 = vmatprep.subr.mxu0 0.0
  %1120 = vmatpush1.msra.mxu0 0.0
  %1121 = vmatprep.subr.mxu0 0.0
  %1122 = vmatpush1.msra.mxu0 0.0
  %1123 = vmatprep.subr.mxu0 0.0
  %1124 = vmatpush1.msra.mxu0 0.0
  %1125 = vmatprep.subr.mxu0 0.0
  %1126 = vmatpush1.msra.mxu0 0.0
  %1127 = vmatprep.mubr.f32.mxu0 0.0
  %1128 = vmatmul.mubr.f32.gmra.mrb[0].mxu0 %v1061
  %v1129 = vpop.f32.mrb[0].mxu0
  %v1130 = vadd.f32 %v1057, %v1129
  %v1131 = vpop.f32.mrb[0].mxu0
  %1132 = vdwg.mxu0
  %1133 = vst [vmem:[%s8] sm:$0xff] %v1130
  // Predicated region
  $region38: #{char_rnn_attention_forward.1} parent=0 // pred_check
    _
  $region39: #{char_rnn_attention_forward.1} parent=0 // pred_check_branch
    %1135 = sbr.rel (0) target = $region41
  $region40: #{char_rnn_attention_forward.1} parent=0 // pred_region
    _
  $region41: #{char_rnn_attention_forward.1} parent=0 // pred_fallthru
    _
  // Predicated region
  $region42: #{char_rnn_attention_forward.1} parent=0 // pred_check
    _
  $region43: #{char_rnn_attention_forward.1} parent=0 // pred_check_branch
    %1137 = sbr.rel (0) target = $region45
  $region44: #{char_rnn_attention_forward.1} parent=0 // pred_region
    _
  $region45: #{char_rnn_attention_forward.1} parent=0 // pred_fallthru
    _

</llo_original>
